<compile_context>
chip_gen: v7x
topology: tpu7x:2x2x1
jax: 0.10.0
libtpu: 0.0.40
codegen_flags: <defaults>
</compile_context>

<pallas_src>
import jax
import jax.numpy as jnp
from jax.experimental import pallas as pl
from jax.experimental.pallas import tpu as pltpu


FILTERS = 16


def _analogy_kernel(w1_ref, b1_ref, w2_ref, b2_ref, a_ref, b_ref, c_ref, out_ref):
    # w1_ref: [F, 2]  (conv1 weight, squeezed)       -- SMEM
    # b1_ref: [F]     (conv1 bias)                   -- SMEM
    # w2_ref: [F, 4]  (conv2 weight, [kh*2+kw] flat) -- SMEM
    # b2_ref: [1]     (conv2 bias)                   -- SMEM
    # a/b/c_ref, out_ref: [TB, E]                    -- VMEM (one batch tile)
    a = a_ref[...]
    b = b_ref[...]
    c = c_ref[...]
    TB, E = a.shape

    # "previous row" taps accumulate un-shifted; the shift is applied once at the end.
    s_prev = jnp.zeros((TB, E), dtype=jnp.float32)
    # fold the conv2 bias into the "current row" accumulator init.
    s_curr = jnp.full((TB, E), b2_ref[0], dtype=jnp.float32)

    for f in range(FILTERS):  # static unroll over the 16 filters
        w00 = w1_ref[f, 0]
        w01 = w1_ref[f, 1]
        t = w00 * a + b1_ref[f]                       # shared between ab and ac
        ab = jnp.maximum(t + w01 * b, 0.0)
        ac = jnp.maximum(t + w01 * c, 0.0)
        s_prev = s_prev + (w2_ref[f, 0] * ab + w2_ref[f, 1] * ac)
        s_curr = s_curr + (w2_ref[f, 2] * ab + w2_ref[f, 3] * ac)

    # single shift-by-one along emb (zero-padded "previous row" of the 2x2 conv)
    lane = jax.lax.broadcasted_iota(jnp.int32, (TB, E), 1)
    shifted = jnp.where(lane == 0, 0.0, pltpu.roll(s_prev, shift=1, axis=1))

    out_ref[...] = s_curr + shifted


def analogy_regression(a, b, c, w1, b1, w2, b2, *, block_batch=None):
    """a, b, c: [B, E] float32. Returns [B, E] float32 (== PyTorch forward with p=0)."""
    B, E = a.shape
    if block_batch is None:
        block_batch = B if B <= 128 else 128
    block_batch = min(block_batch, B)
    # block_shape rule: second-to-last dim must be a multiple of 8 or equal B.
    if block_batch != B and block_batch % 8 != 0:
        block_batch = B

    grid = (pl.cdiv(B, block_batch),)
    smem = pl.BlockSpec(memory_space=pltpu.MemorySpace.SMEM)
    # NOTE: E is kept whole per block — the shift-by-one must not cross tile
    # boundaries (pltpu.roll wraps within the block).
    data_spec = pl.BlockSpec((block_batch, E), lambda i: (i, 0))

    return pl.pallas_call(
        _analogy_kernel,
        out_shape=jax.ShapeDtypeStruct((B, E), jnp.float32),
        grid=grid,
        in_specs=[smem, smem, smem, smem, data_spec, data_spec, data_spec],
        out_specs=data_spec,
        compiler_params=pltpu.CompilerParams(
            dimension_semantics=("parallel",)),   # v7x: shard batch tiles over 2 TCs
    )(w1, b1, w2, b2, a, b, c)


def reference_forward(a, b, c, w1, b1, w2, b2):
    """Pure-JAX reference mirroring the PyTorch module (p=0)."""
    ab = jax.nn.relu(a[..., None] * w1[None, None, :, 0]
                     + b[..., None] * w1[None, None, :, 1] + b1)   # [B, E, F]
    ac = jax.nn.relu(a[..., None] * w1[None, None, :, 0]
                     + c[..., None] * w1[None, None, :, 1] + b1)   # [B, E, F]
    ab_s = jnp.concatenate([jnp.zeros_like(ab[:, :1]), ab[:, :-1]], axis=1)
    ac_s = jnp.concatenate([jnp.zeros_like(ac[:, :1]), ac[:, :-1]], axis=1)
    d = (ab_s @ w2[:, 0] + ac_s @ w2[:, 1] + ab @ w2[:, 2] + ac @ w2[:, 3]) + b2[0]
    return d


if __name__ == "__main__":
    key = jax.random.PRNGKey(0)
    k_a, k_b, k_c, k_w1, k_b1, k_w2, k_b2 = jax.random.split(key, 7)

    batch, emb = 16, 128

    a = jax.random.normal(k_a, (batch, emb), dtype=jnp.float32)
    b = jax.random.normal(k_b, (batch, emb), dtype=jnp.float32)
    c = jax.random.normal(k_c, (batch, emb), dtype=jnp.float32)

    # Deterministic synthetic parameters (shapes match nn.Conv2d(1,16,(1,2)) and
    # nn.Conv2d(16,1,(2,2)), squeezed of their singleton in/out-channel dims).
    w1 = jax.random.normal(k_w1, (FILTERS, 2), dtype=jnp.float32) * 0.5    # conv1 weight [F,1,1,2] -> [F,2]
    b1 = jax.random.normal(k_b1, (FILTERS,), dtype=jnp.float32) * 0.1      # conv1 bias
    w2 = jax.random.normal(k_w2, (FILTERS, 4), dtype=jnp.float32) * 0.5    # conv2 weight [1,F,2,2] -> [F,4]
    b2 = jax.random.normal(k_b2, (1,), dtype=jnp.float32) * 0.1            # conv2 bias

    # block_batch=8 so the grid has >1 step and the batch pipeline is exercised.
    out = analogy_regression(a, b, c, w1, b1, w2, b2, block_batch=8)
    jax.block_until_ready(out)

    ref = reference_forward(a, b, c, w1, b1, w2, b2)
    assert out.shape == (batch, emb)
    assert jnp.allclose(out, ref, rtol=1e-5, atol=1e-5), "mismatch vs reference"

    print("KERNEL_OK")
</pallas_src>

<mosaic_0001>
module attributes {stable_mosaic.version = 11 : i64} {
  func.func @_analogy_kernel(%arg0: i32, %arg1: memref<16x2xf32, #tpu.memory_space<smem>>, %arg2: memref<16xf32, #tpu.memory_space<smem>>, %arg3: memref<16x4xf32, #tpu.memory_space<smem>>, %arg4: memref<1xf32, #tpu.memory_space<smem>>, %arg5: memref<8x128xf32, #tpu.memory_space<vmem>>, %arg6: memref<8x128xf32, #tpu.memory_space<vmem>>, %arg7: memref<8x128xf32, #tpu.memory_space<vmem>>, %arg8: memref<8x128xf32, #tpu.memory_space<vmem>>) attributes {dimension_semantics = [#tpu.dimension_semantics<parallel>], iteration_bounds = array<i64: 2>, scalar_prefetch = 0 : i64, scratch_operands = 0 : i64, tpu.core_type = #tpu.core_type<tc>, window_params = [{transform_indices = @transform_0, window_bounds = array<i64: 16, 2>}, {transform_indices = @transform_1, window_bounds = array<i64: 16>}, {transform_indices = @transform_2, window_bounds = array<i64: 16, 4>}, {transform_indices = @transform_3, window_bounds = array<i64: 1>}, {transform_indices = @transform_4, window_bounds = array<i64: 8, 128>}, {transform_indices = @transform_5, window_bounds = array<i64: 8, 128>}, {transform_indices = @transform_6, window_bounds = array<i64: 8, 128>}, {transform_indices = @transform_7, window_bounds = array<i64: 8, 128>}]} {
    %c0 = arith.constant 0 : index
    %c0_0 = arith.constant 0 : index
    %0 = vector.load %arg5[%c0, %c0_0] : memref<8x128xf32, #tpu.memory_space<vmem>>, vector<8x128xf32>
    %c0_1 = arith.constant 0 : index
    %c0_2 = arith.constant 0 : index
    %1 = vector.load %arg6[%c0_1, %c0_2] : memref<8x128xf32, #tpu.memory_space<vmem>>, vector<8x128xf32>
    %c0_3 = arith.constant 0 : index
    %c0_4 = arith.constant 0 : index
    %2 = vector.load %arg7[%c0_3, %c0_4] : memref<8x128xf32, #tpu.memory_space<vmem>>, vector<8x128xf32>
    %cst = arith.constant 0.000000e+00 : f32
    %3 = vector.broadcast %cst : f32 to vector<8x128xf32>
    %c0_5 = arith.constant 0 : index
    %4 = memref.load %arg4[%c0_5] : memref<1xf32, #tpu.memory_space<smem>>
    %5 = vector.broadcast %4 : f32 to vector<8x128xf32>
    %c0_6 = arith.constant 0 : index
    %c0_7 = arith.constant 0 : index
    %6 = memref.load %arg1[%c0_6, %c0_7] : memref<16x2xf32, #tpu.memory_space<smem>>
    %c0_8 = arith.constant 0 : index
    %c1 = arith.constant 1 : index
    %7 = memref.load %arg1[%c0_8, %c1] : memref<16x2xf32, #tpu.memory_space<smem>>
    %8 = vector.broadcast %6 : f32 to vector<8x128xf32>
    %9 = arith.mulf %8, %0 : vector<8x128xf32>
    %c0_9 = arith.constant 0 : index
    %10 = memref.load %arg2[%c0_9] : memref<16xf32, #tpu.memory_space<smem>>
    %11 = vector.broadcast %10 : f32 to vector<8x128xf32>
    %12 = arith.addf %9, %11 : vector<8x128xf32>
    %13 = vector.broadcast %7 : f32 to vector<8x128xf32>
    %14 = arith.mulf %13, %1 : vector<8x128xf32>
    %15 = arith.addf %12, %14 : vector<8x128xf32>
    %cst_10 = arith.constant 0.000000e+00 : f32
    %16 = vector.broadcast %cst_10 : f32 to vector<8x128xf32>
    %17 = arith.maximumf %15, %16 : vector<8x128xf32>
    %18 = vector.broadcast %7 : f32 to vector<8x128xf32>
    %19 = arith.mulf %18, %2 : vector<8x128xf32>
    %20 = arith.addf %12, %19 : vector<8x128xf32>
    %cst_11 = arith.constant 0.000000e+00 : f32
    %21 = vector.broadcast %cst_11 : f32 to vector<8x128xf32>
    %22 = arith.maximumf %20, %21 : vector<8x128xf32>
    %c0_12 = arith.constant 0 : index
    %c0_13 = arith.constant 0 : index
    %23 = memref.load %arg3[%c0_12, %c0_13] : memref<16x4xf32, #tpu.memory_space<smem>>
    %24 = vector.broadcast %23 : f32 to vector<8x128xf32>
    %25 = arith.mulf %24, %17 : vector<8x128xf32>
    %c0_14 = arith.constant 0 : index
    %c1_15 = arith.constant 1 : index
    %26 = memref.load %arg3[%c0_14, %c1_15] : memref<16x4xf32, #tpu.memory_space<smem>>
    %27 = vector.broadcast %26 : f32 to vector<8x128xf32>
    %28 = arith.mulf %27, %22 : vector<8x128xf32>
    %29 = arith.addf %25, %28 : vector<8x128xf32>
    %30 = arith.addf %3, %29 : vector<8x128xf32>
    %c0_16 = arith.constant 0 : index
    %c2 = arith.constant 2 : index
    %31 = memref.load %arg3[%c0_16, %c2] : memref<16x4xf32, #tpu.memory_space<smem>>
    %32 = vector.broadcast %31 : f32 to vector<8x128xf32>
    %33 = arith.mulf %32, %17 : vector<8x128xf32>
    %c0_17 = arith.constant 0 : index
    %c3 = arith.constant 3 : index
    %34 = memref.load %arg3[%c0_17, %c3] : memref<16x4xf32, #tpu.memory_space<smem>>
    %35 = vector.broadcast %34 : f32 to vector<8x128xf32>
    %36 = arith.mulf %35, %22 : vector<8x128xf32>
    %37 = arith.addf %33, %36 : vector<8x128xf32>
    %38 = arith.addf %5, %37 : vector<8x128xf32>
    %c1_18 = arith.constant 1 : index
    %c0_19 = arith.constant 0 : index
    %39 = memref.load %arg1[%c1_18, %c0_19] : memref<16x2xf32, #tpu.memory_space<smem>>
    %c1_20 = arith.constant 1 : index
    %c1_21 = arith.constant 1 : index
    %40 = memref.load %arg1[%c1_20, %c1_21] : memref<16x2xf32, #tpu.memory_space<smem>>
    %41 = vector.broadcast %39 : f32 to vector<8x128xf32>
    %42 = arith.mulf %41, %0 : vector<8x128xf32>
    %c1_22 = arith.constant 1 : index
    %43 = memref.load %arg2[%c1_22] : memref<16xf32, #tpu.memory_space<smem>>
    %44 = vector.broadcast %43 : f32 to vector<8x128xf32>
    %45 = arith.addf %42, %44 : vector<8x128xf32>
    %46 = vector.broadcast %40 : f32 to vector<8x128xf32>
    %47 = arith.mulf %46, %1 : vector<8x128xf32>
    %48 = arith.addf %45, %47 : vector<8x128xf32>
    %cst_23 = arith.constant 0.000000e+00 : f32
    %49 = vector.broadcast %cst_23 : f32 to vector<8x128xf32>
    %50 = arith.maximumf %48, %49 : vector<8x128xf32>
    %51 = vector.broadcast %40 : f32 to vector<8x128xf32>
    %52 = arith.mulf %51, %2 : vector<8x128xf32>
    %53 = arith.addf %45, %52 : vector<8x128xf32>
    %cst_24 = arith.constant 0.000000e+00 : f32
    %54 = vector.broadcast %cst_24 : f32 to vector<8x128xf32>
    %55 = arith.maximumf %53, %54 : vector<8x128xf32>
    %c1_25 = arith.constant 1 : index
    %c0_26 = arith.constant 0 : index
    %56 = memref.load %arg3[%c1_25, %c0_26] : memref<16x4xf32, #tpu.memory_space<smem>>
    %57 = vector.broadcast %56 : f32 to vector<8x128xf32>
    %58 = arith.mulf %57, %50 : vector<8x128xf32>
    %c1_27 = arith.constant 1 : index
    %c1_28 = arith.constant 1 : index
    %59 = memref.load %arg3[%c1_27, %c1_28] : memref<16x4xf32, #tpu.memory_space<smem>>
    %60 = vector.broadcast %59 : f32 to vector<8x128xf32>
    %61 = arith.mulf %60, %55 : vector<8x128xf32>
    %62 = arith.addf %58, %61 : vector<8x128xf32>
    %63 = arith.addf %30, %62 : vector<8x128xf32>
    %c1_29 = arith.constant 1 : index
    %c2_30 = arith.constant 2 : index
    %64 = memref.load %arg3[%c1_29, %c2_30] : memref<16x4xf32, #tpu.memory_space<smem>>
    %65 = vector.broadcast %64 : f32 to vector<8x128xf32>
    %66 = arith.mulf %65, %50 : vector<8x128xf32>
    %c1_31 = arith.constant 1 : index
    %c3_32 = arith.constant 3 : index
    %67 = memref.load %arg3[%c1_31, %c3_32] : memref<16x4xf32, #tpu.memory_space<smem>>
    %68 = vector.broadcast %67 : f32 to vector<8x128xf32>
    %69 = arith.mulf %68, %55 : vector<8x128xf32>
    %70 = arith.addf %66, %69 : vector<8x128xf32>
    %71 = arith.addf %38, %70 : vector<8x128xf32>
    %c2_33 = arith.constant 2 : index
    %c0_34 = arith.constant 0 : index
    %72 = memref.load %arg1[%c2_33, %c0_34] : memref<16x2xf32, #tpu.memory_space<smem>>
    %c2_35 = arith.constant 2 : index
    %c1_36 = arith.constant 1 : index
    %73 = memref.load %arg1[%c2_35, %c1_36] : memref<16x2xf32, #tpu.memory_space<smem>>
    %74 = vector.broadcast %72 : f32 to vector<8x128xf32>
    %75 = arith.mulf %74, %0 : vector<8x128xf32>
    %c2_37 = arith.constant 2 : index
    %76 = memref.load %arg2[%c2_37] : memref<16xf32, #tpu.memory_space<smem>>
    %77 = vector.broadcast %76 : f32 to vector<8x128xf32>
    %78 = arith.addf %75, %77 : vector<8x128xf32>
    %79 = vector.broadcast %73 : f32 to vector<8x128xf32>
    %80 = arith.mulf %79, %1 : vector<8x128xf32>
    %81 = arith.addf %78, %80 : vector<8x128xf32>
    %cst_38 = arith.constant 0.000000e+00 : f32
    %82 = vector.broadcast %cst_38 : f32 to vector<8x128xf32>
    %83 = arith.maximumf %81, %82 : vector<8x128xf32>
    %84 = vector.broadcast %73 : f32 to vector<8x128xf32>
    %85 = arith.mulf %84, %2 : vector<8x128xf32>
    %86 = arith.addf %78, %85 : vector<8x128xf32>
    %cst_39 = arith.constant 0.000000e+00 : f32
    %87 = vector.broadcast %cst_39 : f32 to vector<8x128xf32>
    %88 = arith.maximumf %86, %87 : vector<8x128xf32>
    %c2_40 = arith.constant 2 : index
    %c0_41 = arith.constant 0 : index
    %89 = memref.load %arg3[%c2_40, %c0_41] : memref<16x4xf32, #tpu.memory_space<smem>>
    %90 = vector.broadcast %89 : f32 to vector<8x128xf32>
    %91 = arith.mulf %90, %83 : vector<8x128xf32>
    %c2_42 = arith.constant 2 : index
    %c1_43 = arith.constant 1 : index
    %92 = memref.load %arg3[%c2_42, %c1_43] : memref<16x4xf32, #tpu.memory_space<smem>>
    %93 = vector.broadcast %92 : f32 to vector<8x128xf32>
    %94 = arith.mulf %93, %88 : vector<8x128xf32>
    %95 = arith.addf %91, %94 : vector<8x128xf32>
    %96 = arith.addf %63, %95 : vector<8x128xf32>
    %c2_44 = arith.constant 2 : index
    %c2_45 = arith.constant 2 : index
    %97 = memref.load %arg3[%c2_44, %c2_45] : memref<16x4xf32, #tpu.memory_space<smem>>
    %98 = vector.broadcast %97 : f32 to vector<8x128xf32>
    %99 = arith.mulf %98, %83 : vector<8x128xf32>
    %c2_46 = arith.constant 2 : index
    %c3_47 = arith.constant 3 : index
    %100 = memref.load %arg3[%c2_46, %c3_47] : memref<16x4xf32, #tpu.memory_space<smem>>
    %101 = vector.broadcast %100 : f32 to vector<8x128xf32>
    %102 = arith.mulf %101, %88 : vector<8x128xf32>
    %103 = arith.addf %99, %102 : vector<8x128xf32>
    %104 = arith.addf %71, %103 : vector<8x128xf32>
    %c3_48 = arith.constant 3 : index
    %c0_49 = arith.constant 0 : index
    %105 = memref.load %arg1[%c3_48, %c0_49] : memref<16x2xf32, #tpu.memory_space<smem>>
    %c3_50 = arith.constant 3 : index
    %c1_51 = arith.constant 1 : index
    %106 = memref.load %arg1[%c3_50, %c1_51] : memref<16x2xf32, #tpu.memory_space<smem>>
    %107 = vector.broadcast %105 : f32 to vector<8x128xf32>
    %108 = arith.mulf %107, %0 : vector<8x128xf32>
    %c3_52 = arith.constant 3 : index
    %109 = memref.load %arg2[%c3_52] : memref<16xf32, #tpu.memory_space<smem>>
    %110 = vector.broadcast %109 : f32 to vector<8x128xf32>
    %111 = arith.addf %108, %110 : vector<8x128xf32>
    %112 = vector.broadcast %106 : f32 to vector<8x128xf32>
    %113 = arith.mulf %112, %1 : vector<8x128xf32>
    %114 = arith.addf %111, %113 : vector<8x128xf32>
    %cst_53 = arith.constant 0.000000e+00 : f32
    %115 = vector.broadcast %cst_53 : f32 to vector<8x128xf32>
    %116 = arith.maximumf %114, %115 : vector<8x128xf32>
    %117 = vector.broadcast %106 : f32 to vector<8x128xf32>
    %118 = arith.mulf %117, %2 : vector<8x128xf32>
    %119 = arith.addf %111, %118 : vector<8x128xf32>
    %cst_54 = arith.constant 0.000000e+00 : f32
    %120 = vector.broadcast %cst_54 : f32 to vector<8x128xf32>
    %121 = arith.maximumf %119, %120 : vector<8x128xf32>
    %c3_55 = arith.constant 3 : index
    %c0_56 = arith.constant 0 : index
    %122 = memref.load %arg3[%c3_55, %c0_56] : memref<16x4xf32, #tpu.memory_space<smem>>
    %123 = vector.broadcast %122 : f32 to vector<8x128xf32>
    %124 = arith.mulf %123, %116 : vector<8x128xf32>
    %c3_57 = arith.constant 3 : index
    %c1_58 = arith.constant 1 : index
    %125 = memref.load %arg3[%c3_57, %c1_58] : memref<16x4xf32, #tpu.memory_space<smem>>
    %126 = vector.broadcast %125 : f32 to vector<8x128xf32>
    %127 = arith.mulf %126, %121 : vector<8x128xf32>
    %128 = arith.addf %124, %127 : vector<8x128xf32>
    %129 = arith.addf %96, %128 : vector<8x128xf32>
    %c3_59 = arith.constant 3 : index
    %c2_60 = arith.constant 2 : index
    %130 = memref.load %arg3[%c3_59, %c2_60] : memref<16x4xf32, #tpu.memory_space<smem>>
    %131 = vector.broadcast %130 : f32 to vector<8x128xf32>
    %132 = arith.mulf %131, %116 : vector<8x128xf32>
    %c3_61 = arith.constant 3 : index
    %c3_62 = arith.constant 3 : index
    %133 = memref.load %arg3[%c3_61, %c3_62] : memref<16x4xf32, #tpu.memory_space<smem>>
    %134 = vector.broadcast %133 : f32 to vector<8x128xf32>
    %135 = arith.mulf %134, %121 : vector<8x128xf32>
    %136 = arith.addf %132, %135 : vector<8x128xf32>
    %137 = arith.addf %104, %136 : vector<8x128xf32>
    %c4 = arith.constant 4 : index
    %c0_63 = arith.constant 0 : index
    %138 = memref.load %arg1[%c4, %c0_63] : memref<16x2xf32, #tpu.memory_space<smem>>
    %c4_64 = arith.constant 4 : index
    %c1_65 = arith.constant 1 : index
    %139 = memref.load %arg1[%c4_64, %c1_65] : memref<16x2xf32, #tpu.memory_space<smem>>
    %140 = vector.broadcast %138 : f32 to vector<8x128xf32>
    %141 = arith.mulf %140, %0 : vector<8x128xf32>
    %c4_66 = arith.constant 4 : index
    %142 = memref.load %arg2[%c4_66] : memref<16xf32, #tpu.memory_space<smem>>
    %143 = vector.broadcast %142 : f32 to vector<8x128xf32>
    %144 = arith.addf %141, %143 : vector<8x128xf32>
    %145 = vector.broadcast %139 : f32 to vector<8x128xf32>
    %146 = arith.mulf %145, %1 : vector<8x128xf32>
    %147 = arith.addf %144, %146 : vector<8x128xf32>
    %cst_67 = arith.constant 0.000000e+00 : f32
    %148 = vector.broadcast %cst_67 : f32 to vector<8x128xf32>
    %149 = arith.maximumf %147, %148 : vector<8x128xf32>
    %150 = vector.broadcast %139 : f32 to vector<8x128xf32>
    %151 = arith.mulf %150, %2 : vector<8x128xf32>
    %152 = arith.addf %144, %151 : vector<8x128xf32>
    %cst_68 = arith.constant 0.000000e+00 : f32
    %153 = vector.broadcast %cst_68 : f32 to vector<8x128xf32>
    %154 = arith.maximumf %152, %153 : vector<8x128xf32>
    %c4_69 = arith.constant 4 : index
    %c0_70 = arith.constant 0 : index
    %155 = memref.load %arg3[%c4_69, %c0_70] : memref<16x4xf32, #tpu.memory_space<smem>>
    %156 = vector.broadcast %155 : f32 to vector<8x128xf32>
    %157 = arith.mulf %156, %149 : vector<8x128xf32>
    %c4_71 = arith.constant 4 : index
    %c1_72 = arith.constant 1 : index
    %158 = memref.load %arg3[%c4_71, %c1_72] : memref<16x4xf32, #tpu.memory_space<smem>>
    %159 = vector.broadcast %158 : f32 to vector<8x128xf32>
    %160 = arith.mulf %159, %154 : vector<8x128xf32>
    %161 = arith.addf %157, %160 : vector<8x128xf32>
    %162 = arith.addf %129, %161 : vector<8x128xf32>
    %c4_73 = arith.constant 4 : index
    %c2_74 = arith.constant 2 : index
    %163 = memref.load %arg3[%c4_73, %c2_74] : memref<16x4xf32, #tpu.memory_space<smem>>
    %164 = vector.broadcast %163 : f32 to vector<8x128xf32>
    %165 = arith.mulf %164, %149 : vector<8x128xf32>
    %c4_75 = arith.constant 4 : index
    %c3_76 = arith.constant 3 : index
    %166 = memref.load %arg3[%c4_75, %c3_76] : memref<16x4xf32, #tpu.memory_space<smem>>
    %167 = vector.broadcast %166 : f32 to vector<8x128xf32>
    %168 = arith.mulf %167, %154 : vector<8x128xf32>
    %169 = arith.addf %165, %168 : vector<8x128xf32>
    %170 = arith.addf %137, %169 : vector<8x128xf32>
    %c5 = arith.constant 5 : index
    %c0_77 = arith.constant 0 : index
    %171 = memref.load %arg1[%c5, %c0_77] : memref<16x2xf32, #tpu.memory_space<smem>>
    %c5_78 = arith.constant 5 : index
    %c1_79 = arith.constant 1 : index
    %172 = memref.load %arg1[%c5_78, %c1_79] : memref<16x2xf32, #tpu.memory_space<smem>>
    %173 = vector.broadcast %171 : f32 to vector<8x128xf32>
    %174 = arith.mulf %173, %0 : vector<8x128xf32>
    %c5_80 = arith.constant 5 : index
    %175 = memref.load %arg2[%c5_80] : memref<16xf32, #tpu.memory_space<smem>>
    %176 = vector.broadcast %175 : f32 to vector<8x128xf32>
    %177 = arith.addf %174, %176 : vector<8x128xf32>
    %178 = vector.broadcast %172 : f32 to vector<8x128xf32>
    %179 = arith.mulf %178, %1 : vector<8x128xf32>
    %180 = arith.addf %177, %179 : vector<8x128xf32>
    %cst_81 = arith.constant 0.000000e+00 : f32
    %181 = vector.broadcast %cst_81 : f32 to vector<8x128xf32>
    %182 = arith.maximumf %180, %181 : vector<8x128xf32>
    %183 = vector.broadcast %172 : f32 to vector<8x128xf32>
    %184 = arith.mulf %183, %2 : vector<8x128xf32>
    %185 = arith.addf %177, %184 : vector<8x128xf32>
    %cst_82 = arith.constant 0.000000e+00 : f32
    %186 = vector.broadcast %cst_82 : f32 to vector<8x128xf32>
    %187 = arith.maximumf %185, %186 : vector<8x128xf32>
    %c5_83 = arith.constant 5 : index
    %c0_84 = arith.constant 0 : index
    %188 = memref.load %arg3[%c5_83, %c0_84] : memref<16x4xf32, #tpu.memory_space<smem>>
    %189 = vector.broadcast %188 : f32 to vector<8x128xf32>
    %190 = arith.mulf %189, %182 : vector<8x128xf32>
    %c5_85 = arith.constant 5 : index
    %c1_86 = arith.constant 1 : index
    %191 = memref.load %arg3[%c5_85, %c1_86] : memref<16x4xf32, #tpu.memory_space<smem>>
    %192 = vector.broadcast %191 : f32 to vector<8x128xf32>
    %193 = arith.mulf %192, %187 : vector<8x128xf32>
    %194 = arith.addf %190, %193 : vector<8x128xf32>
    %195 = arith.addf %162, %194 : vector<8x128xf32>
    %c5_87 = arith.constant 5 : index
    %c2_88 = arith.constant 2 : index
    %196 = memref.load %arg3[%c5_87, %c2_88] : memref<16x4xf32, #tpu.memory_space<smem>>
    %197 = vector.broadcast %196 : f32 to vector<8x128xf32>
    %198 = arith.mulf %197, %182 : vector<8x128xf32>
    %c5_89 = arith.constant 5 : index
    %c3_90 = arith.constant 3 : index
    %199 = memref.load %arg3[%c5_89, %c3_90] : memref<16x4xf32, #tpu.memory_space<smem>>
    %200 = vector.broadcast %199 : f32 to vector<8x128xf32>
    %201 = arith.mulf %200, %187 : vector<8x128xf32>
    %202 = arith.addf %198, %201 : vector<8x128xf32>
    %203 = arith.addf %170, %202 : vector<8x128xf32>
    %c6 = arith.constant 6 : index
    %c0_91 = arith.constant 0 : index
    %204 = memref.load %arg1[%c6, %c0_91] : memref<16x2xf32, #tpu.memory_space<smem>>
    %c6_92 = arith.constant 6 : index
    %c1_93 = arith.constant 1 : index
    %205 = memref.load %arg1[%c6_92, %c1_93] : memref<16x2xf32, #tpu.memory_space<smem>>
    %206 = vector.broadcast %204 : f32 to vector<8x128xf32>
    %207 = arith.mulf %206, %0 : vector<8x128xf32>
    %c6_94 = arith.constant 6 : index
    %208 = memref.load %arg2[%c6_94] : memref<16xf32, #tpu.memory_space<smem>>
    %209 = vector.broadcast %208 : f32 to vector<8x128xf32>
    %210 = arith.addf %207, %209 : vector<8x128xf32>
    %211 = vector.broadcast %205 : f32 to vector<8x128xf32>
    %212 = arith.mulf %211, %1 : vector<8x128xf32>
    %213 = arith.addf %210, %212 : vector<8x128xf32>
    %cst_95 = arith.constant 0.000000e+00 : f32
    %214 = vector.broadcast %cst_95 : f32 to vector<8x128xf32>
    %215 = arith.maximumf %213, %214 : vector<8x128xf32>
    %216 = vector.broadcast %205 : f32 to vector<8x128xf32>
    %217 = arith.mulf %216, %2 : vector<8x128xf32>
    %218 = arith.addf %210, %217 : vector<8x128xf32>
    %cst_96 = arith.constant 0.000000e+00 : f32
    %219 = vector.broadcast %cst_96 : f32 to vector<8x128xf32>
    %220 = arith.maximumf %218, %219 : vector<8x128xf32>
    %c6_97 = arith.constant 6 : index
    %c0_98 = arith.constant 0 : index
    %221 = memref.load %arg3[%c6_97, %c0_98] : memref<16x4xf32, #tpu.memory_space<smem>>
    %222 = vector.broadcast %221 : f32 to vector<8x128xf32>
    %223 = arith.mulf %222, %215 : vector<8x128xf32>
    %c6_99 = arith.constant 6 : index
    %c1_100 = arith.constant 1 : index
    %224 = memref.load %arg3[%c6_99, %c1_100] : memref<16x4xf32, #tpu.memory_space<smem>>
    %225 = vector.broadcast %224 : f32 to vector<8x128xf32>
    %226 = arith.mulf %225, %220 : vector<8x128xf32>
    %227 = arith.addf %223, %226 : vector<8x128xf32>
    %228 = arith.addf %195, %227 : vector<8x128xf32>
    %c6_101 = arith.constant 6 : index
    %c2_102 = arith.constant 2 : index
    %229 = memref.load %arg3[%c6_101, %c2_102] : memref<16x4xf32, #tpu.memory_space<smem>>
    %230 = vector.broadcast %229 : f32 to vector<8x128xf32>
    %231 = arith.mulf %230, %215 : vector<8x128xf32>
    %c6_103 = arith.constant 6 : index
    %c3_104 = arith.constant 3 : index
    %232 = memref.load %arg3[%c6_103, %c3_104] : memref<16x4xf32, #tpu.memory_space<smem>>
    %233 = vector.broadcast %232 : f32 to vector<8x128xf32>
    %234 = arith.mulf %233, %220 : vector<8x128xf32>
    %235 = arith.addf %231, %234 : vector<8x128xf32>
    %236 = arith.addf %203, %235 : vector<8x128xf32>
    %c7 = arith.constant 7 : index
    %c0_105 = arith.constant 0 : index
    %237 = memref.load %arg1[%c7, %c0_105] : memref<16x2xf32, #tpu.memory_space<smem>>
    %c7_106 = arith.constant 7 : index
    %c1_107 = arith.constant 1 : index
    %238 = memref.load %arg1[%c7_106, %c1_107] : memref<16x2xf32, #tpu.memory_space<smem>>
    %239 = vector.broadcast %237 : f32 to vector<8x128xf32>
    %240 = arith.mulf %239, %0 : vector<8x128xf32>
    %c7_108 = arith.constant 7 : index
    %241 = memref.load %arg2[%c7_108] : memref<16xf32, #tpu.memory_space<smem>>
    %242 = vector.broadcast %241 : f32 to vector<8x128xf32>
    %243 = arith.addf %240, %242 : vector<8x128xf32>
    %244 = vector.broadcast %238 : f32 to vector<8x128xf32>
    %245 = arith.mulf %244, %1 : vector<8x128xf32>
    %246 = arith.addf %243, %245 : vector<8x128xf32>
    %cst_109 = arith.constant 0.000000e+00 : f32
    %247 = vector.broadcast %cst_109 : f32 to vector<8x128xf32>
    %248 = arith.maximumf %246, %247 : vector<8x128xf32>
    %249 = vector.broadcast %238 : f32 to vector<8x128xf32>
    %250 = arith.mulf %249, %2 : vector<8x128xf32>
    %251 = arith.addf %243, %250 : vector<8x128xf32>
    %cst_110 = arith.constant 0.000000e+00 : f32
    %252 = vector.broadcast %cst_110 : f32 to vector<8x128xf32>
    %253 = arith.maximumf %251, %252 : vector<8x128xf32>
    %c7_111 = arith.constant 7 : index
    %c0_112 = arith.constant 0 : index
    %254 = memref.load %arg3[%c7_111, %c0_112] : memref<16x4xf32, #tpu.memory_space<smem>>
    %255 = vector.broadcast %254 : f32 to vector<8x128xf32>
    %256 = arith.mulf %255, %248 : vector<8x128xf32>
    %c7_113 = arith.constant 7 : index
    %c1_114 = arith.constant 1 : index
    %257 = memref.load %arg3[%c7_113, %c1_114] : memref<16x4xf32, #tpu.memory_space<smem>>
    %258 = vector.broadcast %257 : f32 to vector<8x128xf32>
    %259 = arith.mulf %258, %253 : vector<8x128xf32>
    %260 = arith.addf %256, %259 : vector<8x128xf32>
    %261 = arith.addf %228, %260 : vector<8x128xf32>
    %c7_115 = arith.constant 7 : index
    %c2_116 = arith.constant 2 : index
    %262 = memref.load %arg3[%c7_115, %c2_116] : memref<16x4xf32, #tpu.memory_space<smem>>
    %263 = vector.broadcast %262 : f32 to vector<8x128xf32>
    %264 = arith.mulf %263, %248 : vector<8x128xf32>
    %c7_117 = arith.constant 7 : index
    %c3_118 = arith.constant 3 : index
    %265 = memref.load %arg3[%c7_117, %c3_118] : memref<16x4xf32, #tpu.memory_space<smem>>
    %266 = vector.broadcast %265 : f32 to vector<8x128xf32>
    %267 = arith.mulf %266, %253 : vector<8x128xf32>
    %268 = arith.addf %264, %267 : vector<8x128xf32>
    %269 = arith.addf %236, %268 : vector<8x128xf32>
    %c8 = arith.constant 8 : index
    %c0_119 = arith.constant 0 : index
    %270 = memref.load %arg1[%c8, %c0_119] : memref<16x2xf32, #tpu.memory_space<smem>>
    %c8_120 = arith.constant 8 : index
    %c1_121 = arith.constant 1 : index
    %271 = memref.load %arg1[%c8_120, %c1_121] : memref<16x2xf32, #tpu.memory_space<smem>>
    %272 = vector.broadcast %270 : f32 to vector<8x128xf32>
    %273 = arith.mulf %272, %0 : vector<8x128xf32>
    %c8_122 = arith.constant 8 : index
    %274 = memref.load %arg2[%c8_122] : memref<16xf32, #tpu.memory_space<smem>>
    %275 = vector.broadcast %274 : f32 to vector<8x128xf32>
    %276 = arith.addf %273, %275 : vector<8x128xf32>
    %277 = vector.broadcast %271 : f32 to vector<8x128xf32>
    %278 = arith.mulf %277, %1 : vector<8x128xf32>
    %279 = arith.addf %276, %278 : vector<8x128xf32>
    %cst_123 = arith.constant 0.000000e+00 : f32
    %280 = vector.broadcast %cst_123 : f32 to vector<8x128xf32>
    %281 = arith.maximumf %279, %280 : vector<8x128xf32>
    %282 = vector.broadcast %271 : f32 to vector<8x128xf32>
    %283 = arith.mulf %282, %2 : vector<8x128xf32>
    %284 = arith.addf %276, %283 : vector<8x128xf32>
    %cst_124 = arith.constant 0.000000e+00 : f32
    %285 = vector.broadcast %cst_124 : f32 to vector<8x128xf32>
    %286 = arith.maximumf %284, %285 : vector<8x128xf32>
    %c8_125 = arith.constant 8 : index
    %c0_126 = arith.constant 0 : index
    %287 = memref.load %arg3[%c8_125, %c0_126] : memref<16x4xf32, #tpu.memory_space<smem>>
    %288 = vector.broadcast %287 : f32 to vector<8x128xf32>
    %289 = arith.mulf %288, %281 : vector<8x128xf32>
    %c8_127 = arith.constant 8 : index
    %c1_128 = arith.constant 1 : index
    %290 = memref.load %arg3[%c8_127, %c1_128] : memref<16x4xf32, #tpu.memory_space<smem>>
    %291 = vector.broadcast %290 : f32 to vector<8x128xf32>
    %292 = arith.mulf %291, %286 : vector<8x128xf32>
    %293 = arith.addf %289, %292 : vector<8x128xf32>
    %294 = arith.addf %261, %293 : vector<8x128xf32>
    %c8_129 = arith.constant 8 : index
    %c2_130 = arith.constant 2 : index
    %295 = memref.load %arg3[%c8_129, %c2_130] : memref<16x4xf32, #tpu.memory_space<smem>>
    %296 = vector.broadcast %295 : f32 to vector<8x128xf32>
    %297 = arith.mulf %296, %281 : vector<8x128xf32>
    %c8_131 = arith.constant 8 : index
    %c3_132 = arith.constant 3 : index
    %298 = memref.load %arg3[%c8_131, %c3_132] : memref<16x4xf32, #tpu.memory_space<smem>>
    %299 = vector.broadcast %298 : f32 to vector<8x128xf32>
    %300 = arith.mulf %299, %286 : vector<8x128xf32>
    %301 = arith.addf %297, %300 : vector<8x128xf32>
    %302 = arith.addf %269, %301 : vector<8x128xf32>
    %c9 = arith.constant 9 : index
    %c0_133 = arith.constant 0 : index
    %303 = memref.load %arg1[%c9, %c0_133] : memref<16x2xf32, #tpu.memory_space<smem>>
    %c9_134 = arith.constant 9 : index
    %c1_135 = arith.constant 1 : index
    %304 = memref.load %arg1[%c9_134, %c1_135] : memref<16x2xf32, #tpu.memory_space<smem>>
    %305 = vector.broadcast %303 : f32 to vector<8x128xf32>
    %306 = arith.mulf %305, %0 : vector<8x128xf32>
    %c9_136 = arith.constant 9 : index
    %307 = memref.load %arg2[%c9_136] : memref<16xf32, #tpu.memory_space<smem>>
    %308 = vector.broadcast %307 : f32 to vector<8x128xf32>
    %309 = arith.addf %306, %308 : vector<8x128xf32>
    %310 = vector.broadcast %304 : f32 to vector<8x128xf32>
    %311 = arith.mulf %310, %1 : vector<8x128xf32>
    %312 = arith.addf %309, %311 : vector<8x128xf32>
    %cst_137 = arith.constant 0.000000e+00 : f32
    %313 = vector.broadcast %cst_137 : f32 to vector<8x128xf32>
    %314 = arith.maximumf %312, %313 : vector<8x128xf32>
    %315 = vector.broadcast %304 : f32 to vector<8x128xf32>
    %316 = arith.mulf %315, %2 : vector<8x128xf32>
    %317 = arith.addf %309, %316 : vector<8x128xf32>
    %cst_138 = arith.constant 0.000000e+00 : f32
    %318 = vector.broadcast %cst_138 : f32 to vector<8x128xf32>
    %319 = arith.maximumf %317, %318 : vector<8x128xf32>
    %c9_139 = arith.constant 9 : index
    %c0_140 = arith.constant 0 : index
    %320 = memref.load %arg3[%c9_139, %c0_140] : memref<16x4xf32, #tpu.memory_space<smem>>
    %321 = vector.broadcast %320 : f32 to vector<8x128xf32>
    %322 = arith.mulf %321, %314 : vector<8x128xf32>
    %c9_141 = arith.constant 9 : index
    %c1_142 = arith.constant 1 : index
    %323 = memref.load %arg3[%c9_141, %c1_142] : memref<16x4xf32, #tpu.memory_space<smem>>
    %324 = vector.broadcast %323 : f32 to vector<8x128xf32>
    %325 = arith.mulf %324, %319 : vector<8x128xf32>
    %326 = arith.addf %322, %325 : vector<8x128xf32>
    %327 = arith.addf %294, %326 : vector<8x128xf32>
    %c9_143 = arith.constant 9 : index
    %c2_144 = arith.constant 2 : index
    %328 = memref.load %arg3[%c9_143, %c2_144] : memref<16x4xf32, #tpu.memory_space<smem>>
    %329 = vector.broadcast %328 : f32 to vector<8x128xf32>
    %330 = arith.mulf %329, %314 : vector<8x128xf32>
    %c9_145 = arith.constant 9 : index
    %c3_146 = arith.constant 3 : index
    %331 = memref.load %arg3[%c9_145, %c3_146] : memref<16x4xf32, #tpu.memory_space<smem>>
    %332 = vector.broadcast %331 : f32 to vector<8x128xf32>
    %333 = arith.mulf %332, %319 : vector<8x128xf32>
    %334 = arith.addf %330, %333 : vector<8x128xf32>
    %335 = arith.addf %302, %334 : vector<8x128xf32>
    %c10 = arith.constant 10 : index
    %c0_147 = arith.constant 0 : index
    %336 = memref.load %arg1[%c10, %c0_147] : memref<16x2xf32, #tpu.memory_space<smem>>
    %c10_148 = arith.constant 10 : index
    %c1_149 = arith.constant 1 : index
    %337 = memref.load %arg1[%c10_148, %c1_149] : memref<16x2xf32, #tpu.memory_space<smem>>
    %338 = vector.broadcast %336 : f32 to vector<8x128xf32>
    %339 = arith.mulf %338, %0 : vector<8x128xf32>
    %c10_150 = arith.constant 10 : index
    %340 = memref.load %arg2[%c10_150] : memref<16xf32, #tpu.memory_space<smem>>
    %341 = vector.broadcast %340 : f32 to vector<8x128xf32>
    %342 = arith.addf %339, %341 : vector<8x128xf32>
    %343 = vector.broadcast %337 : f32 to vector<8x128xf32>
    %344 = arith.mulf %343, %1 : vector<8x128xf32>
    %345 = arith.addf %342, %344 : vector<8x128xf32>
    %cst_151 = arith.constant 0.000000e+00 : f32
    %346 = vector.broadcast %cst_151 : f32 to vector<8x128xf32>
    %347 = arith.maximumf %345, %346 : vector<8x128xf32>
    %348 = vector.broadcast %337 : f32 to vector<8x128xf32>
    %349 = arith.mulf %348, %2 : vector<8x128xf32>
    %350 = arith.addf %342, %349 : vector<8x128xf32>
    %cst_152 = arith.constant 0.000000e+00 : f32
    %351 = vector.broadcast %cst_152 : f32 to vector<8x128xf32>
    %352 = arith.maximumf %350, %351 : vector<8x128xf32>
    %c10_153 = arith.constant 10 : index
    %c0_154 = arith.constant 0 : index
    %353 = memref.load %arg3[%c10_153, %c0_154] : memref<16x4xf32, #tpu.memory_space<smem>>
    %354 = vector.broadcast %353 : f32 to vector<8x128xf32>
    %355 = arith.mulf %354, %347 : vector<8x128xf32>
    %c10_155 = arith.constant 10 : index
    %c1_156 = arith.constant 1 : index
    %356 = memref.load %arg3[%c10_155, %c1_156] : memref<16x4xf32, #tpu.memory_space<smem>>
    %357 = vector.broadcast %356 : f32 to vector<8x128xf32>
    %358 = arith.mulf %357, %352 : vector<8x128xf32>
    %359 = arith.addf %355, %358 : vector<8x128xf32>
    %360 = arith.addf %327, %359 : vector<8x128xf32>
    %c10_157 = arith.constant 10 : index
    %c2_158 = arith.constant 2 : index
    %361 = memref.load %arg3[%c10_157, %c2_158] : memref<16x4xf32, #tpu.memory_space<smem>>
    %362 = vector.broadcast %361 : f32 to vector<8x128xf32>
    %363 = arith.mulf %362, %347 : vector<8x128xf32>
    %c10_159 = arith.constant 10 : index
    %c3_160 = arith.constant 3 : index
    %364 = memref.load %arg3[%c10_159, %c3_160] : memref<16x4xf32, #tpu.memory_space<smem>>
    %365 = vector.broadcast %364 : f32 to vector<8x128xf32>
    %366 = arith.mulf %365, %352 : vector<8x128xf32>
    %367 = arith.addf %363, %366 : vector<8x128xf32>
    %368 = arith.addf %335, %367 : vector<8x128xf32>
    %c11 = arith.constant 11 : index
    %c0_161 = arith.constant 0 : index
    %369 = memref.load %arg1[%c11, %c0_161] : memref<16x2xf32, #tpu.memory_space<smem>>
    %c11_162 = arith.constant 11 : index
    %c1_163 = arith.constant 1 : index
    %370 = memref.load %arg1[%c11_162, %c1_163] : memref<16x2xf32, #tpu.memory_space<smem>>
    %371 = vector.broadcast %369 : f32 to vector<8x128xf32>
    %372 = arith.mulf %371, %0 : vector<8x128xf32>
    %c11_164 = arith.constant 11 : index
    %373 = memref.load %arg2[%c11_164] : memref<16xf32, #tpu.memory_space<smem>>
    %374 = vector.broadcast %373 : f32 to vector<8x128xf32>
    %375 = arith.addf %372, %374 : vector<8x128xf32>
    %376 = vector.broadcast %370 : f32 to vector<8x128xf32>
    %377 = arith.mulf %376, %1 : vector<8x128xf32>
    %378 = arith.addf %375, %377 : vector<8x128xf32>
    %cst_165 = arith.constant 0.000000e+00 : f32
    %379 = vector.broadcast %cst_165 : f32 to vector<8x128xf32>
    %380 = arith.maximumf %378, %379 : vector<8x128xf32>
    %381 = vector.broadcast %370 : f32 to vector<8x128xf32>
    %382 = arith.mulf %381, %2 : vector<8x128xf32>
    %383 = arith.addf %375, %382 : vector<8x128xf32>
    %cst_166 = arith.constant 0.000000e+00 : f32
    %384 = vector.broadcast %cst_166 : f32 to vector<8x128xf32>
    %385 = arith.maximumf %383, %384 : vector<8x128xf32>
    %c11_167 = arith.constant 11 : index
    %c0_168 = arith.constant 0 : index
    %386 = memref.load %arg3[%c11_167, %c0_168] : memref<16x4xf32, #tpu.memory_space<smem>>
    %387 = vector.broadcast %386 : f32 to vector<8x128xf32>
    %388 = arith.mulf %387, %380 : vector<8x128xf32>
    %c11_169 = arith.constant 11 : index
    %c1_170 = arith.constant 1 : index
    %389 = memref.load %arg3[%c11_169, %c1_170] : memref<16x4xf32, #tpu.memory_space<smem>>
    %390 = vector.broadcast %389 : f32 to vector<8x128xf32>
    %391 = arith.mulf %390, %385 : vector<8x128xf32>
    %392 = arith.addf %388, %391 : vector<8x128xf32>
    %393 = arith.addf %360, %392 : vector<8x128xf32>
    %c11_171 = arith.constant 11 : index
    %c2_172 = arith.constant 2 : index
    %394 = memref.load %arg3[%c11_171, %c2_172] : memref<16x4xf32, #tpu.memory_space<smem>>
    %395 = vector.broadcast %394 : f32 to vector<8x128xf32>
    %396 = arith.mulf %395, %380 : vector<8x128xf32>
    %c11_173 = arith.constant 11 : index
    %c3_174 = arith.constant 3 : index
    %397 = memref.load %arg3[%c11_173, %c3_174] : memref<16x4xf32, #tpu.memory_space<smem>>
    %398 = vector.broadcast %397 : f32 to vector<8x128xf32>
    %399 = arith.mulf %398, %385 : vector<8x128xf32>
    %400 = arith.addf %396, %399 : vector<8x128xf32>
    %401 = arith.addf %368, %400 : vector<8x128xf32>
    %c12 = arith.constant 12 : index
    %c0_175 = arith.constant 0 : index
    %402 = memref.load %arg1[%c12, %c0_175] : memref<16x2xf32, #tpu.memory_space<smem>>
    %c12_176 = arith.constant 12 : index
    %c1_177 = arith.constant 1 : index
    %403 = memref.load %arg1[%c12_176, %c1_177] : memref<16x2xf32, #tpu.memory_space<smem>>
    %404 = vector.broadcast %402 : f32 to vector<8x128xf32>
    %405 = arith.mulf %404, %0 : vector<8x128xf32>
    %c12_178 = arith.constant 12 : index
    %406 = memref.load %arg2[%c12_178] : memref<16xf32, #tpu.memory_space<smem>>
    %407 = vector.broadcast %406 : f32 to vector<8x128xf32>
    %408 = arith.addf %405, %407 : vector<8x128xf32>
    %409 = vector.broadcast %403 : f32 to vector<8x128xf32>
    %410 = arith.mulf %409, %1 : vector<8x128xf32>
    %411 = arith.addf %408, %410 : vector<8x128xf32>
    %cst_179 = arith.constant 0.000000e+00 : f32
    %412 = vector.broadcast %cst_179 : f32 to vector<8x128xf32>
    %413 = arith.maximumf %411, %412 : vector<8x128xf32>
    %414 = vector.broadcast %403 : f32 to vector<8x128xf32>
    %415 = arith.mulf %414, %2 : vector<8x128xf32>
    %416 = arith.addf %408, %415 : vector<8x128xf32>
    %cst_180 = arith.constant 0.000000e+00 : f32
    %417 = vector.broadcast %cst_180 : f32 to vector<8x128xf32>
    %418 = arith.maximumf %416, %417 : vector<8x128xf32>
    %c12_181 = arith.constant 12 : index
    %c0_182 = arith.constant 0 : index
    %419 = memref.load %arg3[%c12_181, %c0_182] : memref<16x4xf32, #tpu.memory_space<smem>>
    %420 = vector.broadcast %419 : f32 to vector<8x128xf32>
    %421 = arith.mulf %420, %413 : vector<8x128xf32>
    %c12_183 = arith.constant 12 : index
    %c1_184 = arith.constant 1 : index
    %422 = memref.load %arg3[%c12_183, %c1_184] : memref<16x4xf32, #tpu.memory_space<smem>>
    %423 = vector.broadcast %422 : f32 to vector<8x128xf32>
    %424 = arith.mulf %423, %418 : vector<8x128xf32>
    %425 = arith.addf %421, %424 : vector<8x128xf32>
    %426 = arith.addf %393, %425 : vector<8x128xf32>
    %c12_185 = arith.constant 12 : index
    %c2_186 = arith.constant 2 : index
    %427 = memref.load %arg3[%c12_185, %c2_186] : memref<16x4xf32, #tpu.memory_space<smem>>
    %428 = vector.broadcast %427 : f32 to vector<8x128xf32>
    %429 = arith.mulf %428, %413 : vector<8x128xf32>
    %c12_187 = arith.constant 12 : index
    %c3_188 = arith.constant 3 : index
    %430 = memref.load %arg3[%c12_187, %c3_188] : memref<16x4xf32, #tpu.memory_space<smem>>
    %431 = vector.broadcast %430 : f32 to vector<8x128xf32>
    %432 = arith.mulf %431, %418 : vector<8x128xf32>
    %433 = arith.addf %429, %432 : vector<8x128xf32>
    %434 = arith.addf %401, %433 : vector<8x128xf32>
    %c13 = arith.constant 13 : index
    %c0_189 = arith.constant 0 : index
    %435 = memref.load %arg1[%c13, %c0_189] : memref<16x2xf32, #tpu.memory_space<smem>>
    %c13_190 = arith.constant 13 : index
    %c1_191 = arith.constant 1 : index
    %436 = memref.load %arg1[%c13_190, %c1_191] : memref<16x2xf32, #tpu.memory_space<smem>>
    %437 = vector.broadcast %435 : f32 to vector<8x128xf32>
    %438 = arith.mulf %437, %0 : vector<8x128xf32>
    %c13_192 = arith.constant 13 : index
    %439 = memref.load %arg2[%c13_192] : memref<16xf32, #tpu.memory_space<smem>>
    %440 = vector.broadcast %439 : f32 to vector<8x128xf32>
    %441 = arith.addf %438, %440 : vector<8x128xf32>
    %442 = vector.broadcast %436 : f32 to vector<8x128xf32>
    %443 = arith.mulf %442, %1 : vector<8x128xf32>
    %444 = arith.addf %441, %443 : vector<8x128xf32>
    %cst_193 = arith.constant 0.000000e+00 : f32
    %445 = vector.broadcast %cst_193 : f32 to vector<8x128xf32>
    %446 = arith.maximumf %444, %445 : vector<8x128xf32>
    %447 = vector.broadcast %436 : f32 to vector<8x128xf32>
    %448 = arith.mulf %447, %2 : vector<8x128xf32>
    %449 = arith.addf %441, %448 : vector<8x128xf32>
    %cst_194 = arith.constant 0.000000e+00 : f32
    %450 = vector.broadcast %cst_194 : f32 to vector<8x128xf32>
    %451 = arith.maximumf %449, %450 : vector<8x128xf32>
    %c13_195 = arith.constant 13 : index
    %c0_196 = arith.constant 0 : index
    %452 = memref.load %arg3[%c13_195, %c0_196] : memref<16x4xf32, #tpu.memory_space<smem>>
    %453 = vector.broadcast %452 : f32 to vector<8x128xf32>
    %454 = arith.mulf %453, %446 : vector<8x128xf32>
    %c13_197 = arith.constant 13 : index
    %c1_198 = arith.constant 1 : index
    %455 = memref.load %arg3[%c13_197, %c1_198] : memref<16x4xf32, #tpu.memory_space<smem>>
    %456 = vector.broadcast %455 : f32 to vector<8x128xf32>
    %457 = arith.mulf %456, %451 : vector<8x128xf32>
    %458 = arith.addf %454, %457 : vector<8x128xf32>
    %459 = arith.addf %426, %458 : vector<8x128xf32>
    %c13_199 = arith.constant 13 : index
    %c2_200 = arith.constant 2 : index
    %460 = memref.load %arg3[%c13_199, %c2_200] : memref<16x4xf32, #tpu.memory_space<smem>>
    %461 = vector.broadcast %460 : f32 to vector<8x128xf32>
    %462 = arith.mulf %461, %446 : vector<8x128xf32>
    %c13_201 = arith.constant 13 : index
    %c3_202 = arith.constant 3 : index
    %463 = memref.load %arg3[%c13_201, %c3_202] : memref<16x4xf32, #tpu.memory_space<smem>>
    %464 = vector.broadcast %463 : f32 to vector<8x128xf32>
    %465 = arith.mulf %464, %451 : vector<8x128xf32>
    %466 = arith.addf %462, %465 : vector<8x128xf32>
    %467 = arith.addf %434, %466 : vector<8x128xf32>
    %c14 = arith.constant 14 : index
    %c0_203 = arith.constant 0 : index
    %468 = memref.load %arg1[%c14, %c0_203] : memref<16x2xf32, #tpu.memory_space<smem>>
    %c14_204 = arith.constant 14 : index
    %c1_205 = arith.constant 1 : index
    %469 = memref.load %arg1[%c14_204, %c1_205] : memref<16x2xf32, #tpu.memory_space<smem>>
    %470 = vector.broadcast %468 : f32 to vector<8x128xf32>
    %471 = arith.mulf %470, %0 : vector<8x128xf32>
    %c14_206 = arith.constant 14 : index
    %472 = memref.load %arg2[%c14_206] : memref<16xf32, #tpu.memory_space<smem>>
    %473 = vector.broadcast %472 : f32 to vector<8x128xf32>
    %474 = arith.addf %471, %473 : vector<8x128xf32>
    %475 = vector.broadcast %469 : f32 to vector<8x128xf32>
    %476 = arith.mulf %475, %1 : vector<8x128xf32>
    %477 = arith.addf %474, %476 : vector<8x128xf32>
    %cst_207 = arith.constant 0.000000e+00 : f32
    %478 = vector.broadcast %cst_207 : f32 to vector<8x128xf32>
    %479 = arith.maximumf %477, %478 : vector<8x128xf32>
    %480 = vector.broadcast %469 : f32 to vector<8x128xf32>
    %481 = arith.mulf %480, %2 : vector<8x128xf32>
    %482 = arith.addf %474, %481 : vector<8x128xf32>
    %cst_208 = arith.constant 0.000000e+00 : f32
    %483 = vector.broadcast %cst_208 : f32 to vector<8x128xf32>
    %484 = arith.maximumf %482, %483 : vector<8x128xf32>
    %c14_209 = arith.constant 14 : index
    %c0_210 = arith.constant 0 : index
    %485 = memref.load %arg3[%c14_209, %c0_210] : memref<16x4xf32, #tpu.memory_space<smem>>
    %486 = vector.broadcast %485 : f32 to vector<8x128xf32>
    %487 = arith.mulf %486, %479 : vector<8x128xf32>
    %c14_211 = arith.constant 14 : index
    %c1_212 = arith.constant 1 : index
    %488 = memref.load %arg3[%c14_211, %c1_212] : memref<16x4xf32, #tpu.memory_space<smem>>
    %489 = vector.broadcast %488 : f32 to vector<8x128xf32>
    %490 = arith.mulf %489, %484 : vector<8x128xf32>
    %491 = arith.addf %487, %490 : vector<8x128xf32>
    %492 = arith.addf %459, %491 : vector<8x128xf32>
    %c14_213 = arith.constant 14 : index
    %c2_214 = arith.constant 2 : index
    %493 = memref.load %arg3[%c14_213, %c2_214] : memref<16x4xf32, #tpu.memory_space<smem>>
    %494 = vector.broadcast %493 : f32 to vector<8x128xf32>
    %495 = arith.mulf %494, %479 : vector<8x128xf32>
    %c14_215 = arith.constant 14 : index
    %c3_216 = arith.constant 3 : index
    %496 = memref.load %arg3[%c14_215, %c3_216] : memref<16x4xf32, #tpu.memory_space<smem>>
    %497 = vector.broadcast %496 : f32 to vector<8x128xf32>
    %498 = arith.mulf %497, %484 : vector<8x128xf32>
    %499 = arith.addf %495, %498 : vector<8x128xf32>
    %500 = arith.addf %467, %499 : vector<8x128xf32>
    %c15 = arith.constant 15 : index
    %c0_217 = arith.constant 0 : index
    %501 = memref.load %arg1[%c15, %c0_217] : memref<16x2xf32, #tpu.memory_space<smem>>
    %c15_218 = arith.constant 15 : index
    %c1_219 = arith.constant 1 : index
    %502 = memref.load %arg1[%c15_218, %c1_219] : memref<16x2xf32, #tpu.memory_space<smem>>
    %503 = vector.broadcast %501 : f32 to vector<8x128xf32>
    %504 = arith.mulf %503, %0 : vector<8x128xf32>
    %c15_220 = arith.constant 15 : index
    %505 = memref.load %arg2[%c15_220] : memref<16xf32, #tpu.memory_space<smem>>
    %506 = vector.broadcast %505 : f32 to vector<8x128xf32>
    %507 = arith.addf %504, %506 : vector<8x128xf32>
    %508 = vector.broadcast %502 : f32 to vector<8x128xf32>
    %509 = arith.mulf %508, %1 : vector<8x128xf32>
    %510 = arith.addf %507, %509 : vector<8x128xf32>
    %cst_221 = arith.constant 0.000000e+00 : f32
    %511 = vector.broadcast %cst_221 : f32 to vector<8x128xf32>
    %512 = arith.maximumf %510, %511 : vector<8x128xf32>
    %513 = vector.broadcast %502 : f32 to vector<8x128xf32>
    %514 = arith.mulf %513, %2 : vector<8x128xf32>
    %515 = arith.addf %507, %514 : vector<8x128xf32>
    %cst_222 = arith.constant 0.000000e+00 : f32
    %516 = vector.broadcast %cst_222 : f32 to vector<8x128xf32>
    %517 = arith.maximumf %515, %516 : vector<8x128xf32>
    %c15_223 = arith.constant 15 : index
    %c0_224 = arith.constant 0 : index
    %518 = memref.load %arg3[%c15_223, %c0_224] : memref<16x4xf32, #tpu.memory_space<smem>>
    %519 = vector.broadcast %518 : f32 to vector<8x128xf32>
    %520 = arith.mulf %519, %512 : vector<8x128xf32>
    %c15_225 = arith.constant 15 : index
    %c1_226 = arith.constant 1 : index
    %521 = memref.load %arg3[%c15_225, %c1_226] : memref<16x4xf32, #tpu.memory_space<smem>>
    %522 = vector.broadcast %521 : f32 to vector<8x128xf32>
    %523 = arith.mulf %522, %517 : vector<8x128xf32>
    %524 = arith.addf %520, %523 : vector<8x128xf32>
    %525 = arith.addf %492, %524 : vector<8x128xf32>
    %c15_227 = arith.constant 15 : index
    %c2_228 = arith.constant 2 : index
    %526 = memref.load %arg3[%c15_227, %c2_228] : memref<16x4xf32, #tpu.memory_space<smem>>
    %527 = vector.broadcast %526 : f32 to vector<8x128xf32>
    %528 = arith.mulf %527, %512 : vector<8x128xf32>
    %c15_229 = arith.constant 15 : index
    %c3_230 = arith.constant 3 : index
    %529 = memref.load %arg3[%c15_229, %c3_230] : memref<16x4xf32, #tpu.memory_space<smem>>
    %530 = vector.broadcast %529 : f32 to vector<8x128xf32>
    %531 = arith.mulf %530, %517 : vector<8x128xf32>
    %532 = arith.addf %528, %531 : vector<8x128xf32>
    %533 = arith.addf %500, %532 : vector<8x128xf32>
    %534 = tpu.iota {dimensions = array<i32: 1>} : vector<8x128xi32>
    %c0_i32 = arith.constant 0 : i32
    %535 = vector.broadcast %c0_i32 : i32 to vector<8x128xi32>
    %536 = arith.cmpi eq, %534, %535 : vector<8x128xi32>
    %c1_i32 = arith.constant 1 : i32
    %537 = tpu.dynamic_rotate %525 by %c1_i32 dim 1 : vector<8x128xf32>, i32 -> vector<8x128xf32>
    %cst_231 = arith.constant 0.000000e+00 : f32
    %538 = vector.broadcast %cst_231 : f32 to vector<8x128xf32>
    %539 = arith.select %536, %538, %537 : vector<8x128xi1>, vector<8x128xf32>
    %540 = arith.addf %533, %539 : vector<8x128xf32>
    %c0_232 = arith.constant 0 : index
    %c0_233 = arith.constant 0 : index
    %541 = vector.load %arg8[%c0_232, %c0_233] : memref<8x128xf32, #tpu.memory_space<vmem>>, vector<8x128xf32>
    tpu.vector_store %arg8[%c0_232, %c0_233], %540 {strides = array<i32>} : memref<8x128xf32, #tpu.memory_space<vmem>>, vector<8x128xf32>,
    return
  }
  func.func @transform_0(%arg0: i32) -> (i32, i32) {
    %c0_i32 = arith.constant 0 : i32
    %c0_i32_0 = arith.constant 0 : i32
    %c0_i32_1 = arith.constant 0 : i32
    return %c0_i32, %c0_i32_0 : i32, i32
  }
  func.func @transform_1(%arg0: i32) -> i32 {
    %c0_i32 = arith.constant 0 : i32
    %c0_i32_0 = arith.constant 0 : i32
    return %c0_i32 : i32
  }
  func.func @transform_2(%arg0: i32) -> (i32, i32) {
    %c0_i32 = arith.constant 0 : i32
    %c0_i32_0 = arith.constant 0 : i32
    %c0_i32_1 = arith.constant 0 : i32
    return %c0_i32, %c0_i32_0 : i32, i32
  }
  func.func @transform_3(%arg0: i32) -> i32 {
    %c0_i32 = arith.constant 0 : i32
    %c0_i32_0 = arith.constant 0 : i32
    return %c0_i32 : i32
  }
  func.func @transform_4(%arg0: i32) -> (i32, i32) {
    %c0_i32 = arith.constant 0 : i32
    %c0_i32_0 = arith.constant 0 : i32
    return %arg0, %c0_i32 : i32, i32
  }
  func.func @transform_5(%arg0: i32) -> (i32, i32) {
    %c0_i32 = arith.constant 0 : i32
    %c0_i32_0 = arith.constant 0 : i32
    return %arg0, %c0_i32 : i32, i32
  }
  func.func @transform_6(%arg0: i32) -> (i32, i32) {
    %c0_i32 = arith.constant 0 : i32
    %c0_i32_0 = arith.constant 0 : i32
    return %arg0, %c0_i32 : i32, i32
  }
  func.func @transform_7(%arg0: i32) -> (i32, i32) {
    %c0_i32 = arith.constant 0 : i32
    %c0_i32_0 = arith.constant 0 : i32
    return %arg0, %c0_i32 : i32, i32
  }
}

</mosaic_0001>

<llo_original>
// kernel: tpu_custom_call.1
$region0: #{tpu_custom_call.1}
  #allocation0 [shape = 'u32[]', space=smem, size = 0x4, offset = 0x4, fixed_abs, tag = 'smem constant byte address 0x4 - core index']
  #allocation1 [shape = 'u32[144,128]{1,0:T(1,128)}', space=vmem, size = 0x12000, scoped, tag = 'internal scratch']
  #allocation2 [shape = 'f32[1]{0:T(128)S(6)}', space=smem, size = 0x200, scoped, tag = 'scoped memory for tpu_custom_call.1']
  %s0 = inlined_call_operand.vmem [shape: f32[16,2], index: 0, kind: input, shape index: {}]
  %s1 = inlined_call_operand.vmem [shape: f32[16], index: 1, kind: input, shape index: {}]
  %s2 = inlined_call_operand.vmem [shape: f32[16,4], index: 2, kind: input, shape index: {}]
  %s3 = inlined_call_operand.<no memory space> [shape: f32[1], index: 3, kind: input, shape index: {}]
  %s4 = inlined_call_operand.vmem [shape: f32[16,128], index: 4, kind: input, shape index: {}]
  %s5 = inlined_call_operand.vmem [shape: f32[16,128], index: 5, kind: input, shape index: {}]
  %s6 = inlined_call_operand.vmem [shape: f32[16,128], index: 6, kind: input, shape index: {}]
  %s7 = inlined_call_operand.hbm [shape: f32[16,128], index: 7, kind: output, shape index: {}]
  %s8 = sld [smem:[#allocation0]]
  $region73: #{tpu_custom_call.1} parent=0
    _
  %s10 = ssub.s32 1, %s8
  %s11 = scalar_select 0, %s10, %s8
  %12 = sst [smem:[#allocation2]] %s3
  $region1: #{tpu_custom_call.1} parent=0
    #allocation3 [shape = 'u8[8192]{0}', space=smem, size = 0x2000, scoped, tag = 'input window, operand 0, single buffered']
    #allocation4 [shape = 's32[2]{0}', space=sflag, size = 0x8, scoped, tag = 'scoped memory for tpu_custom_call.1']
    #allocation5 [shape = 's32[2]{0}', space=sflag, size = 0x8, scoped, tag = 'scoped memory for tpu_custom_call.1']
    #allocation6 [shape = 'u8[512]{0}', space=smem, size = 0x200, scoped, tag = 'input window, operand 1, single buffered']
    #allocation7 [shape = 's32[1]{0}', space=sflag, size = 0x4, scoped, tag = 'scoped memory for tpu_custom_call.1']
    #allocation8 [shape = 'u8[8192]{0}', space=smem, size = 0x2000, scoped, tag = 'input window, operand 2, single buffered']
    #allocation9 [shape = 'u8[8192]{0}', space=vmem, size = 0x2000, scoped, tag = 'output window, operand 0']
    %13 = vsyncpa [#allocation5], 0
    %14 = vsyncpa [#allocation7], 0
    %15 = vsyncpa [#allocation4], 0
    %s16 = scalar_lea.sflag [#allocation4], 1
    %17 = vsyncpa %s16, 0
    loop: start=0, step=1, limit=4
    $region2: #{tpu_custom_call.1} parent=1 // loop_pre_header
      _
    $region3: #{tpu_custom_call.1} parent=1 // loop_header
      %s19 = sphi 0, %s23
      %p20 = scmp.ge.s32.totalorder %s19, 4
      %s27 = sphi 0, %s27
      %s29 = sphi 0, %s27
      %s30 = sphi 0, %s29
      %s44 = sphi 0, %s30
      %s48 = sphi 0, %s48
      %s50 = sphi 0, %s48
      %s51 = sphi 0, %s50
      %s65 = sphi 0, %s51
      %s69 = sphi 0, %s69
      %s71 = sphi 0, %s69
      %s72 = sphi 0, %s71
      %s86 = sphi 0, %s72
      %s90 = sphi 0, %s90
      %s92 = sphi 0, %s90
      %s93 = sphi 0, %s92
      %s107 = sphi 0, %s93
      %s113 = sphi 0, %s115
      %s116 = sphi 0, %s113
      %s117 = sphi 0, %s116
      %s133 = sphi 0, %s117
      %s139 = sphi 0, %s141
      %s142 = sphi 0, %s139
      %s143 = sphi 0, %s142
      %s159 = sphi 0, %s143
      %s165 = sphi 0, %s167
      %s168 = sphi 0, %s165
      %s169 = sphi 0, %s168
      %s185 = sphi 0, %s169
      %s191 = sphi 0, %s193
      %s194 = sphi 0, %s191
      %s195 = sphi 0, %s194
      %s211 = sphi 0, %s195
    $region4: #{tpu_custom_call.1} parent=1 // loop_header_branch
      %22 = sbr.rel (%p20) target = $region8
    $region5: #{tpu_custom_call.1} parent=1 // loop_body
      %s24 = ssub.s32 %s19, 1
      %s25 = ssub.s32 %s19, 2
      %s26 = sadd.s32 %s19, 1
      %s28 = sadd.s32 %s27, 1
      %p31 = scmp.eq.s32.totalorder %s19, 1
      %p32 = scmp.ne.s32.totalorder %s27, %s29
      %p33 = scmp.eq.s32.totalorder %s19, 0
      %p34 = por %p32, %p33
      %p35 = scmp.ne.s32.totalorder %s27, %s29
      %p36 = scmp.eq.s32.totalorder %s24, 1
      %p37 = por %p35, %p36
      %p38 = scmp.ne.s32.totalorder %s29, %s30
      %p39 = scmp.eq.s32.totalorder %s24, 0
      %p40 = por %p38, %p39
      %p41 = scmp.ne.s32.totalorder %s29, %s30
      %p42 = scmp.eq.s32.totalorder %s25, 1
      %p43 = por %p41, %p42
      %p45 = scmp.ne.s32.totalorder %s30, %s44
      %p46 = scmp.eq.s32.totalorder %s25, 0
      %p47 = por %p45, %p46
      %s49 = sadd.s32 %s48, 1
      %p52 = scmp.eq.s32.totalorder %s19, 1
      %p53 = scmp.ne.s32.totalorder %s48, %s50
      %p54 = scmp.eq.s32.totalorder %s19, 0
      %p55 = por %p53, %p54
      %p56 = scmp.ne.s32.totalorder %s48, %s50
      %p57 = scmp.eq.s32.totalorder %s24, 1
      %p58 = por %p56, %p57
      %p59 = scmp.ne.s32.totalorder %s50, %s51
      %p60 = scmp.eq.s32.totalorder %s24, 0
      %p61 = por %p59, %p60
      %p62 = scmp.ne.s32.totalorder %s50, %s51
      %p63 = scmp.eq.s32.totalorder %s25, 1
      %p64 = por %p62, %p63
      %p66 = scmp.ne.s32.totalorder %s51, %s65
      %p67 = scmp.eq.s32.totalorder %s25, 0
      %p68 = por %p66, %p67
      %s70 = sadd.s32 %s69, 1
      %p73 = scmp.eq.s32.totalorder %s19, 1
      %p74 = scmp.ne.s32.totalorder %s69, %s71
      %p75 = scmp.eq.s32.totalorder %s19, 0
      %p76 = por %p74, %p75
      %p77 = scmp.ne.s32.totalorder %s69, %s71
      %p78 = scmp.eq.s32.totalorder %s24, 1
      %p79 = por %p77, %p78
      %p80 = scmp.ne.s32.totalorder %s71, %s72
      %p81 = scmp.eq.s32.totalorder %s24, 0
      %p82 = por %p80, %p81
      %p83 = scmp.ne.s32.totalorder %s71, %s72
      %p84 = scmp.eq.s32.totalorder %s25, 1
      %p85 = por %p83, %p84
      %p87 = scmp.ne.s32.totalorder %s72, %s86
      %p88 = scmp.eq.s32.totalorder %s25, 0
      %p89 = por %p87, %p88
      %s91 = sadd.s32 %s90, 1
      %p94 = scmp.eq.s32.totalorder %s19, 1
      %p95 = scmp.ne.s32.totalorder %s90, %s92
      %p96 = scmp.eq.s32.totalorder %s19, 0
      %p97 = por %p95, %p96
      %p98 = scmp.ne.s32.totalorder %s90, %s92
      %p99 = scmp.eq.s32.totalorder %s24, 1
      %p100 = por %p98, %p99
      %p101 = scmp.ne.s32.totalorder %s92, %s93
      %p102 = scmp.eq.s32.totalorder %s24, 0
      %p103 = por %p101, %p102
      %p104 = scmp.ne.s32.totalorder %s92, %s93
      %p105 = scmp.eq.s32.totalorder %s25, 1
      %p106 = por %p104, %p105
      %p108 = scmp.ne.s32.totalorder %s93, %s107
      %p109 = scmp.eq.s32.totalorder %s25, 0
      %p110 = por %p108, %p109
      %s111 = ssub.s32 %s19, %s26
      %p112 = scmp.eq.s32.totalorder %s111, 0
      %s114 = sadd.s32 %s113, 1
      %s115 = scalar_select %p112, %s113, %s114
      %p118 = pneg %p112
      %p119 = scmp.eq.s32.totalorder %s19, 1
      %p120 = por %p118, %p119
      %p121 = scmp.ne.s32.totalorder %s113, %s116
      %p122 = scmp.eq.s32.totalorder %s19, 0
      %p123 = por %p121, %p122
      %p124 = scmp.ne.s32.totalorder %s113, %s116
      %p125 = scmp.eq.s32.totalorder %s24, 1
      %p126 = por %p124, %p125
      %p127 = scmp.ne.s32.totalorder %s116, %s117
      %p128 = scmp.eq.s32.totalorder %s24, 0
      %p129 = por %p127, %p128
      %p130 = scmp.ne.s32.totalorder %s116, %s117
      %p131 = scmp.eq.s32.totalorder %s25, 1
      %p132 = por %p130, %p131
      %p134 = scmp.ne.s32.totalorder %s117, %s133
      %p135 = scmp.eq.s32.totalorder %s25, 0
      %p136 = por %p134, %p135
      %s137 = ssub.s32 %s19, %s26
      %p138 = scmp.eq.s32.totalorder %s137, 0
      %s140 = sadd.s32 %s139, 1
      %s141 = scalar_select %p138, %s139, %s140
      %p144 = pneg %p138
      %p145 = scmp.eq.s32.totalorder %s19, 1
      %p146 = por %p144, %p145
      %p147 = scmp.ne.s32.totalorder %s139, %s142
      %p148 = scmp.eq.s32.totalorder %s19, 0
      %p149 = por %p147, %p148
      %p150 = scmp.ne.s32.totalorder %s139, %s142
      %p151 = scmp.eq.s32.totalorder %s24, 1
      %p152 = por %p150, %p151
      %p153 = scmp.ne.s32.totalorder %s142, %s143
      %p154 = scmp.eq.s32.totalorder %s24, 0
      %p155 = por %p153, %p154
      %p156 = scmp.ne.s32.totalorder %s142, %s143
      %p157 = scmp.eq.s32.totalorder %s25, 1
      %p158 = por %p156, %p157
      %p160 = scmp.ne.s32.totalorder %s143, %s159
      %p161 = scmp.eq.s32.totalorder %s25, 0
      %p162 = por %p160, %p161
      %s163 = ssub.s32 %s19, %s26
      %p164 = scmp.eq.s32.totalorder %s163, 0
      %s166 = sadd.s32 %s165, 1
      %s167 = scalar_select %p164, %s165, %s166
      %p170 = pneg %p164
      %p171 = scmp.eq.s32.totalorder %s19, 1
      %p172 = por %p170, %p171
      %p173 = scmp.ne.s32.totalorder %s165, %s168
      %p174 = scmp.eq.s32.totalorder %s19, 0
      %p175 = por %p173, %p174
      %p176 = scmp.ne.s32.totalorder %s165, %s168
      %p177 = scmp.eq.s32.totalorder %s24, 1
      %p178 = por %p176, %p177
      %p179 = scmp.ne.s32.totalorder %s168, %s169
      %p180 = scmp.eq.s32.totalorder %s24, 0
      %p181 = por %p179, %p180
      %p182 = scmp.ne.s32.totalorder %s168, %s169
      %p183 = scmp.eq.s32.totalorder %s25, 1
      %p184 = por %p182, %p183
      %p186 = scmp.ne.s32.totalorder %s169, %s185
      %p187 = scmp.eq.s32.totalorder %s25, 0
      %p188 = por %p186, %p187
      %s189 = ssub.s32 %s19, %s26
      %p190 = scmp.eq.s32.totalorder %s189, 0
      %s192 = sadd.s32 %s191, 1
      %s193 = scalar_select %p190, %s191, %s192
      %p196 = pneg %p190
      %p197 = scmp.eq.s32.totalorder %s19, 1
      %p198 = por %p196, %p197
      %p199 = scmp.ne.s32.totalorder %s191, %s194
      %p200 = scmp.eq.s32.totalorder %s19, 0
      %p201 = por %p199, %p200
      %p202 = scmp.ne.s32.totalorder %s191, %s194
      %p203 = scmp.eq.s32.totalorder %s24, 1
      %p204 = por %p202, %p203
      %p205 = scmp.ne.s32.totalorder %s194, %s195
      %p206 = scmp.eq.s32.totalorder %s24, 0
      %p207 = por %p205, %p206
      %p208 = scmp.ne.s32.totalorder %s194, %s195
      %p209 = scmp.eq.s32.totalorder %s25, 1
      %p210 = por %p208, %p209
      %p212 = scmp.ne.s32.totalorder %s195, %s211
      %p213 = scmp.eq.s32.totalorder %s25, 0
      %p214 = por %p212, %p213
      %p215 = scmp.le.s32.totalorder 1, %s19
      %p216 = scmp.lt.s32.totalorder %s19, 3
      %p217 = pnand %p215, %p216
      %p218 = pneg %p217
      // Predicated region
      $region9: #{tpu_custom_call.1} parent=5 // pred_check
        _
      $region10: #{tpu_custom_call.1} parent=5 // pred_check_branch
        %220 = sbr.rel (%p217) target = $region12
      $region11: #{tpu_custom_call.1} parent=5 // pred_region
        %s221 = ssub.s32 %s19, 1
        // Predicated region
        $region13: #{tpu_custom_call.1} parent=11 // pred_check
          %p222 = pneg %p40
        $region14: #{tpu_custom_call.1} parent=11 // pred_check_branch
          %224 = sbr.rel (%p222) target = $region16
        $region15: #{tpu_custom_call.1} parent=11 // pred_region
          %s226 = ssub.s32 256, 256
          %227 = vsyncadd [#allocation5], %s226
          %s228 = sshll.u32 %s0, 4
          %s229 = int_to_ptr.vmem [resolvable:$true] %s228
          %234 = dma.vmem_to_smem %s229, 256, [#allocation3], [#allocation5], 128, 128, 8
        $region16: #{tpu_custom_call.1} parent=11 // pred_fallthru
          _
        // Predicated region
        $region17: #{tpu_custom_call.1} parent=11 // pred_check
          %p235 = pneg %p61
        $region18: #{tpu_custom_call.1} parent=11 // pred_check_branch
          %237 = sbr.rel (%p235) target = $region20
        $region19: #{tpu_custom_call.1} parent=11 // pred_region
          %s239 = ssub.s32 16, 16
          %240 = vsyncadd [#allocation7], %s239
          %s242 = sshll.u32 %s1, 4
          %s243 = int_to_ptr.vmem [resolvable:$true] %s242
          %245 = dma.vmem_to_smem %s243, 16, [#allocation6], [#allocation7]
        $region20: #{tpu_custom_call.1} parent=11 // pred_fallthru
          _
        // Predicated region
        $region21: #{tpu_custom_call.1} parent=11 // pred_check
          %p246 = pneg %p82
        $region22: #{tpu_custom_call.1} parent=11 // pred_check_branch
          %248 = sbr.rel (%p246) target = $region24
        $region23: #{tpu_custom_call.1} parent=11 // pred_region
          %s250 = ssub.s32 256, 256
          %251 = vsyncadd [#allocation7], %s250
          %s252 = sshll.u32 %s2, 4
          %s253 = int_to_ptr.vmem [resolvable:$true] %s252
          %258 = dma.vmem_to_smem %s253, 256, [#allocation8], [#allocation7], 128, 128, 8
        $region24: #{tpu_custom_call.1} parent=11 // pred_fallthru
          _
        // Predicated region
        $region25: #{tpu_custom_call.1} parent=11 // pred_check
          %p259 = pneg %p103
        $region26: #{tpu_custom_call.1} parent=11 // pred_check_branch
          %261 = sbr.rel (%p259) target = $region28
        $region27: #{tpu_custom_call.1} parent=11 // pred_region
          _
        $region28: #{tpu_custom_call.1} parent=11 // pred_fallthru
          _
      $region12: #{tpu_custom_call.1} parent=5 // pred_fallthru
        _
      %p262 = scmp.lt.s32.totalorder %s19, 2
      // Predicated region
      $region29: #{tpu_custom_call.1} parent=5 // pred_check
        %p263 = pneg %p262
      $region30: #{tpu_custom_call.1} parent=5 // pred_check_branch
        %265 = sbr.rel (%p263) target = $region32
      $region31: #{tpu_custom_call.1} parent=5 // pred_region
        // Predicated region
        $region33: #{tpu_custom_call.1} parent=31 // pred_check
          %p266 = pneg %p123
        $region34: #{tpu_custom_call.1} parent=31 // pred_check_branch
          %268 = sbr.rel (%p266) target = $region36
        $region35: #{tpu_custom_call.1} parent=31 // pred_region
          %p269 = scmp.lt.s32.totalorder %s19, 1
          %s270 = scalar_select %p269, %s19, 1
          %s271 = smul.addr %s270, 8
          %s272 = scalar_lea.vmem %s4, %s271
        $region36: #{tpu_custom_call.1} parent=31 // pred_fallthru
          _
        // Predicated region
        $region37: #{tpu_custom_call.1} parent=31 // pred_check
          %p273 = pneg %p149
        $region38: #{tpu_custom_call.1} parent=31 // pred_check_branch
          %275 = sbr.rel (%p273) target = $region40
        $region39: #{tpu_custom_call.1} parent=31 // pred_region
          %p276 = scmp.lt.s32.totalorder %s19, 1
          %s277 = scalar_select %p276, %s19, 1
          %s278 = smul.addr %s277, 8
          %s279 = scalar_lea.vmem %s5, %s278
        $region40: #{tpu_custom_call.1} parent=31 // pred_fallthru
          _
        // Predicated region
        $region41: #{tpu_custom_call.1} parent=31 // pred_check
          %p280 = pneg %p175
        $region42: #{tpu_custom_call.1} parent=31 // pred_check_branch
          %282 = sbr.rel (%p280) target = $region44
        $region43: #{tpu_custom_call.1} parent=31 // pred_region
          %p283 = scmp.lt.s32.totalorder %s19, 1
          %s284 = scalar_select %p283, %s19, 1
          %s285 = smul.addr %s284, 8
          %s286 = scalar_lea.vmem %s6, %s285
        $region44: #{tpu_custom_call.1} parent=31 // pred_fallthru
          _
      $region32: #{tpu_custom_call.1} parent=5 // pred_fallthru
        _
      %p287 = scmp.le.s32.totalorder 1, %s19
      %p288 = scmp.lt.s32.totalorder %s19, 3
      %p289 = pnand %p287, %p288
      %p290 = pneg %p289
      // Predicated region
      $region45: #{tpu_custom_call.1} parent=5 // pred_check
        _
      $region46: #{tpu_custom_call.1} parent=5 // pred_check_branch
        %292 = sbr.rel (%p289) target = $region48
      $region47: #{tpu_custom_call.1} parent=5 // pred_region
        %s293 = ssub.s32 %s19, 1
        // Predicated region
        $region49: #{tpu_custom_call.1} parent=47 // pred_check
          %p294 = pneg %p40
        $region50: #{tpu_custom_call.1} parent=47 // pred_check_branch
          %296 = sbr.rel (%p294) target = $region52
        $region51: #{tpu_custom_call.1} parent=47 // pred_region
          %297 = dma.done [#allocation5], 256
        $region52: #{tpu_custom_call.1} parent=47 // pred_fallthru
          _
        // Predicated region
        $region53: #{tpu_custom_call.1} parent=47 // pred_check
          %p298 = pneg %p61
        $region54: #{tpu_custom_call.1} parent=47 // pred_check_branch
          %300 = sbr.rel (%p298) target = $region56
        $region55: #{tpu_custom_call.1} parent=47 // pred_region
          %301 = dma.done [#allocation7], 16
        $region56: #{tpu_custom_call.1} parent=47 // pred_fallthru
          _
        // Predicated region
        $region57: #{tpu_custom_call.1} parent=47 // pred_check
          %p302 = pneg %p82
        $region58: #{tpu_custom_call.1} parent=47 // pred_check_branch
          %304 = sbr.rel (%p302) target = $region60
        $region59: #{tpu_custom_call.1} parent=47 // pred_region
          %305 = dma.done [#allocation7], 256
        $region60: #{tpu_custom_call.1} parent=47 // pred_fallthru
          _
        %306 = sfence
        %p307 = pneg %p40
        %p308 = pneg %p37
        %p309 = pneg %p61
        %p310 = pneg %p58
        %p311 = pneg %p82
        %p312 = pneg %p79
        %p313 = pneg %p103
        %p314 = pneg %p100
        %p315 = scmp.lt.s32.totalorder %s24, 1
        %s316 = scalar_select %p315, %s24, 1
        %s317 = smul.addr %s316, 8
        %s318 = scalar_lea.vmem %s4, %s317
        %p319 = pneg %p129
        %p320 = pneg %p126
        %p321 = scmp.lt.s32.totalorder %s24, 1
        %s322 = scalar_select %p321, %s24, 1
        %s323 = smul.addr %s322, 8
        %s324 = scalar_lea.vmem %s5, %s323
        %p325 = pneg %p155
        %p326 = pneg %p152
        %p327 = scmp.lt.s32.totalorder %s24, 1
        %s328 = scalar_select %p327, %s24, 1
        %s329 = smul.addr %s328, 8
        %s330 = scalar_lea.vmem %s6, %s329
        %p331 = pneg %p181
        %p332 = pneg %p178
        %p333 = pneg %p207
        %p334 = pneg %p204
        %s335 = sand.u32 %s194, 1
        %s336 = scalar_lea.sflag [#allocation4], %s335
        %s337 = sand.u32 %s194, 1
        %s338 = smul.addr %s337, 8
        %s339 = scalar_lea.vmem [#allocation9], %s338
        %p340 = scmp.lt.s32.totalorder %s24, 1
        %s341 = scalar_select %p340, %s24, 1
        %s342 = smul.addr %s341, 8
        %s343 = scalar_lea.vmem %s4, %s342
        %p344 = scmp.lt.s32.totalorder %s24, 1
        %s345 = scalar_select %p344, %s24, 1
        %s346 = smul.addr %s345, 8
        %s347 = scalar_lea.vmem %s5, %s346
        %p348 = scmp.lt.s32.totalorder %s24, 1
        %s349 = scalar_select %p348, %s24, 1
        %s350 = smul.addr %s349, 8
        %s351 = scalar_lea.vmem %s6, %s350
        %v352 = vld [vmem:[%s343] sm:$0xff]
        %v353 = vld [vmem:[%s347] sm:$0xff]
        %v354 = vld [vmem:[%s351] sm:$0xff]
        %s355 = sld [smem:[#allocation2]]
        %v356 = vstv %s355
        %s357 = sld [smem:[#allocation3]]
        %s358 = sld [smem:[#allocation3 + $0x1]]
        %v359 = vstv %s357
        %v360 = vmul.f32 %v359, %v352
        %s361 = sld [smem:[#allocation6]]
        %v362 = vstv %s361
        %v363 = vadd.f32 %v360, %v362
        %v364 = vstv %s358
        %v365 = vmul.f32 %v364, %v353
        %v366 = vadd.f32 %v363, %v365
        %v367 = vmax.f32 %v366, 0.0
        %v368 = vmul.f32 %v364, %v354
        %v369 = vadd.f32 %v363, %v368
        %v370 = vmax.f32 %v369, 0.0
        %s371 = sld [smem:[#allocation8]]
        %v372 = vstv %s371
        %v373 = vmul.f32 %v372, %v367
        %s374 = sld [smem:[#allocation8 + $0x1]]
        %v375 = vstv %s374
        %v376 = vmul.f32 %v375, %v370
        %v377 = vadd.f32 %v373, %v376
        %v378 = vadd.f32 %v377, 0.0
        %s379 = sld [smem:[#allocation8 + $0x2]]
        %v380 = vstv %s379
        %v381 = vmul.f32 %v380, %v367
        %s382 = sld [smem:[#allocation8 + $0x3]]
        %v383 = vstv %s382
        %v384 = vmul.f32 %v383, %v370
        %v385 = vadd.f32 %v381, %v384
        %v386 = vadd.f32 %v356, %v385
        %s387 = sld [smem:[#allocation3 + $0x80]]
        %s388 = sld [smem:[#allocation3 + $0x81]]
        %v389 = vstv %s387
        %v390 = vmul.f32 %v389, %v352
        %s391 = sld [smem:[#allocation6 + $0x1]]
        %v392 = vstv %s391
        %v393 = vadd.f32 %v390, %v392
        %v394 = vstv %s388
        %v395 = vmul.f32 %v394, %v353
        %v396 = vadd.f32 %v393, %v395
        %v397 = vmax.f32 %v396, 0.0
        %v398 = vmul.f32 %v394, %v354
        %v399 = vadd.f32 %v393, %v398
        %v400 = vmax.f32 %v399, 0.0
        %s401 = sld [smem:[#allocation8 + $0x80]]
        %v402 = vstv %s401
        %v403 = vmul.f32 %v402, %v397
        %s404 = sld [smem:[#allocation8 + $0x81]]
        %v405 = vstv %s404
        %v406 = vmul.f32 %v405, %v400
        %v407 = vadd.f32 %v403, %v406
        %v408 = vadd.f32 %v378, %v407
        %s409 = sld [smem:[#allocation8 + $0x82]]
        %v410 = vstv %s409
        %v411 = vmul.f32 %v410, %v397
        %s412 = sld [smem:[#allocation8 + $0x83]]
        %v413 = vstv %s412
        %v414 = vmul.f32 %v413, %v400
        %v415 = vadd.f32 %v411, %v414
        %v416 = vadd.f32 %v386, %v415
        %s417 = sld [smem:[#allocation3 + $0x100]]
        %s418 = sld [smem:[#allocation3 + $0x101]]
        %v419 = vstv %s417
        %v420 = vmul.f32 %v419, %v352
        %s421 = sld [smem:[#allocation6 + $0x2]]
        %v422 = vstv %s421
        %v423 = vadd.f32 %v420, %v422
        %v424 = vstv %s418
        %v425 = vmul.f32 %v424, %v353
        %v426 = vadd.f32 %v423, %v425
        %v427 = vmax.f32 %v426, 0.0
        %v428 = vmul.f32 %v424, %v354
        %v429 = vadd.f32 %v423, %v428
        %v430 = vmax.f32 %v429, 0.0
        %s431 = sld [smem:[#allocation8 + $0x100]]
        %v432 = vstv %s431
        %v433 = vmul.f32 %v432, %v427
        %s434 = sld [smem:[#allocation8 + $0x101]]
        %v435 = vstv %s434
        %v436 = vmul.f32 %v435, %v430
        %v437 = vadd.f32 %v433, %v436
        %v438 = vadd.f32 %v408, %v437
        %s439 = sld [smem:[#allocation8 + $0x102]]
        %v440 = vstv %s439
        %v441 = vmul.f32 %v440, %v427
        %s442 = sld [smem:[#allocation8 + $0x103]]
        %v443 = vstv %s442
        %v444 = vmul.f32 %v443, %v430
        %v445 = vadd.f32 %v441, %v444
        %v446 = vadd.f32 %v416, %v445
        %s447 = sld [smem:[#allocation3 + $0x180]]
        %s448 = sld [smem:[#allocation3 + $0x181]]
        %v449 = vstv %s447
        %v450 = vmul.f32 %v449, %v352
        %s451 = sld [smem:[#allocation6 + $0x3]]
        %v452 = vstv %s451
        %v453 = vadd.f32 %v450, %v452
        %v454 = vstv %s448
        %v455 = vmul.f32 %v454, %v353
        %v456 = vadd.f32 %v453, %v455
        %v457 = vmax.f32 %v456, 0.0
        %v458 = vmul.f32 %v454, %v354
        %v459 = vadd.f32 %v453, %v458
        %v460 = vmax.f32 %v459, 0.0
        %s461 = sld [smem:[#allocation8 + $0x180]]
        %v462 = vstv %s461
        %v463 = vmul.f32 %v462, %v457
        %s464 = sld [smem:[#allocation8 + $0x181]]
        %v465 = vstv %s464
        %v466 = vmul.f32 %v465, %v460
        %v467 = vadd.f32 %v463, %v466
        %v468 = vadd.f32 %v438, %v467
        %s469 = sld [smem:[#allocation8 + $0x182]]
        %v470 = vstv %s469
        %v471 = vmul.f32 %v470, %v457
        %s472 = sld [smem:[#allocation8 + $0x183]]
        %v473 = vstv %s472
        %v474 = vmul.f32 %v473, %v460
        %v475 = vadd.f32 %v471, %v474
        %v476 = vadd.f32 %v446, %v475
        %s477 = sld [smem:[#allocation3 + $0x200]]
        %s478 = sld [smem:[#allocation3 + $0x201]]
        %v479 = vstv %s477
        %v480 = vmul.f32 %v479, %v352
        %s481 = sld [smem:[#allocation6 + $0x4]]
        %v482 = vstv %s481
        %v483 = vadd.f32 %v480, %v482
        %v484 = vstv %s478
        %v485 = vmul.f32 %v484, %v353
        %v486 = vadd.f32 %v483, %v485
        %v487 = vmax.f32 %v486, 0.0
        %v488 = vmul.f32 %v484, %v354
        %v489 = vadd.f32 %v483, %v488
        %v490 = vmax.f32 %v489, 0.0
        %s491 = sld [smem:[#allocation8 + $0x200]]
        %v492 = vstv %s491
        %v493 = vmul.f32 %v492, %v487
        %s494 = sld [smem:[#allocation8 + $0x201]]
        %v495 = vstv %s494
        %v496 = vmul.f32 %v495, %v490
        %v497 = vadd.f32 %v493, %v496
        %v498 = vadd.f32 %v468, %v497
        %s499 = sld [smem:[#allocation8 + $0x202]]
        %v500 = vstv %s499
        %v501 = vmul.f32 %v500, %v487
        %s502 = sld [smem:[#allocation8 + $0x203]]
        %v503 = vstv %s502
        %v504 = vmul.f32 %v503, %v490
        %v505 = vadd.f32 %v501, %v504
        %v506 = vadd.f32 %v476, %v505
        %s507 = sld [smem:[#allocation3 + $0x280]]
        %s508 = sld [smem:[#allocation3 + $0x281]]
        %v509 = vstv %s507
        %v510 = vmul.f32 %v509, %v352
        %s511 = sld [smem:[#allocation6 + $0x5]]
        %v512 = vstv %s511
        %v513 = vadd.f32 %v510, %v512
        %v514 = vstv %s508
        %v515 = vmul.f32 %v514, %v353
        %v516 = vadd.f32 %v513, %v515
        %v517 = vmax.f32 %v516, 0.0
        %v518 = vmul.f32 %v514, %v354
        %v519 = vadd.f32 %v513, %v518
        %v520 = vmax.f32 %v519, 0.0
        %s521 = sld [smem:[#allocation8 + $0x280]]
        %v522 = vstv %s521
        %v523 = vmul.f32 %v522, %v517
        %s524 = sld [smem:[#allocation8 + $0x281]]
        %v525 = vstv %s524
        %v526 = vmul.f32 %v525, %v520
        %v527 = vadd.f32 %v523, %v526
        %v528 = vadd.f32 %v498, %v527
        %s529 = sld [smem:[#allocation8 + $0x282]]
        %v530 = vstv %s529
        %v531 = vmul.f32 %v530, %v517
        %s532 = sld [smem:[#allocation8 + $0x283]]
        %v533 = vstv %s532
        %v534 = vmul.f32 %v533, %v520
        %v535 = vadd.f32 %v531, %v534
        %v536 = vadd.f32 %v506, %v535
        %s537 = sld [smem:[#allocation3 + $0x300]]
        %s538 = sld [smem:[#allocation3 + $0x301]]
        %v539 = vstv %s537
        %v540 = vmul.f32 %v539, %v352
        %s541 = sld [smem:[#allocation6 + $0x6]]
        %v542 = vstv %s541
        %v543 = vadd.f32 %v540, %v542
        %v544 = vstv %s538
        %v545 = vmul.f32 %v544, %v353
        %v546 = vadd.f32 %v543, %v545
        %v547 = vmax.f32 %v546, 0.0
        %v548 = vmul.f32 %v544, %v354
        %v549 = vadd.f32 %v543, %v548
        %v550 = vmax.f32 %v549, 0.0
        %s551 = sld [smem:[#allocation8 + $0x300]]
        %v552 = vstv %s551
        %v553 = vmul.f32 %v552, %v547
        %s554 = sld [smem:[#allocation8 + $0x301]]
        %v555 = vstv %s554
        %v556 = vmul.f32 %v555, %v550
        %v557 = vadd.f32 %v553, %v556
        %v558 = vadd.f32 %v528, %v557
        %s559 = sld [smem:[#allocation8 + $0x302]]
        %v560 = vstv %s559
        %v561 = vmul.f32 %v560, %v547
        %s562 = sld [smem:[#allocation8 + $0x303]]
        %v563 = vstv %s562
        %v564 = vmul.f32 %v563, %v550
        %v565 = vadd.f32 %v561, %v564
        %v566 = vadd.f32 %v536, %v565
        %s567 = sld [smem:[#allocation3 + $0x380]]
        %s568 = sld [smem:[#allocation3 + $0x381]]
        %v569 = vstv %s567
        %v570 = vmul.f32 %v569, %v352
        %s571 = sld [smem:[#allocation6 + $0x7]]
        %v572 = vstv %s571
        %v573 = vadd.f32 %v570, %v572
        %v574 = vstv %s568
        %v575 = vmul.f32 %v574, %v353
        %v576 = vadd.f32 %v573, %v575
        %v577 = vmax.f32 %v576, 0.0
        %v578 = vmul.f32 %v574, %v354
        %v579 = vadd.f32 %v573, %v578
        %v580 = vmax.f32 %v579, 0.0
        %s581 = sld [smem:[#allocation8 + $0x380]]
        %v582 = vstv %s581
        %v583 = vmul.f32 %v582, %v577
        %s584 = sld [smem:[#allocation8 + $0x381]]
        %v585 = vstv %s584
        %v586 = vmul.f32 %v585, %v580
        %v587 = vadd.f32 %v583, %v586
        %v588 = vadd.f32 %v558, %v587
        %s589 = sld [smem:[#allocation8 + $0x382]]
        %v590 = vstv %s589
        %v591 = vmul.f32 %v590, %v577
        %s592 = sld [smem:[#allocation8 + $0x383]]
        %v593 = vstv %s592
        %v594 = vmul.f32 %v593, %v580
        %v595 = vadd.f32 %v591, %v594
        %v596 = vadd.f32 %v566, %v595
        %s597 = sld [smem:[#allocation3 + $0x400]]
        %s598 = sld [smem:[#allocation3 + $0x401]]
        %v599 = vstv %s597
        %v600 = vmul.f32 %v599, %v352
        %s601 = sld [smem:[#allocation6 + $0x8]]
        %v602 = vstv %s601
        %v603 = vadd.f32 %v600, %v602
        %v604 = vstv %s598
        %v605 = vmul.f32 %v604, %v353
        %v606 = vadd.f32 %v603, %v605
        %v607 = vmax.f32 %v606, 0.0
        %v608 = vmul.f32 %v604, %v354
        %v609 = vadd.f32 %v603, %v608
        %v610 = vmax.f32 %v609, 0.0
        %s611 = sld [smem:[#allocation8 + $0x400]]
        %v612 = vstv %s611
        %v613 = vmul.f32 %v612, %v607
        %s614 = sld [smem:[#allocation8 + $0x401]]
        %v615 = vstv %s614
        %v616 = vmul.f32 %v615, %v610
        %v617 = vadd.f32 %v613, %v616
        %v618 = vadd.f32 %v588, %v617
        %s619 = sld [smem:[#allocation8 + $0x402]]
        %v620 = vstv %s619
        %v621 = vmul.f32 %v620, %v607
        %s622 = sld [smem:[#allocation8 + $0x403]]
        %v623 = vstv %s622
        %v624 = vmul.f32 %v623, %v610
        %v625 = vadd.f32 %v621, %v624
        %v626 = vadd.f32 %v596, %v625
        %s627 = sld [smem:[#allocation3 + $0x480]]
        %s628 = sld [smem:[#allocation3 + $0x481]]
        %v629 = vstv %s627
        %v630 = vmul.f32 %v629, %v352
        %s631 = sld [smem:[#allocation6 + $0x9]]
        %v632 = vstv %s631
        %v633 = vadd.f32 %v630, %v632
        %v634 = vstv %s628
        %v635 = vmul.f32 %v634, %v353
        %v636 = vadd.f32 %v633, %v635
        %v637 = vmax.f32 %v636, 0.0
        %v638 = vmul.f32 %v634, %v354
        %v639 = vadd.f32 %v633, %v638
        %v640 = vmax.f32 %v639, 0.0
        %s641 = sld [smem:[#allocation8 + $0x480]]
        %v642 = vstv %s641
        %v643 = vmul.f32 %v642, %v637
        %s644 = sld [smem:[#allocation8 + $0x481]]
        %v645 = vstv %s644
        %v646 = vmul.f32 %v645, %v640
        %v647 = vadd.f32 %v643, %v646
        %v648 = vadd.f32 %v618, %v647
        %s649 = sld [smem:[#allocation8 + $0x482]]
        %v650 = vstv %s649
        %v651 = vmul.f32 %v650, %v637
        %s652 = sld [smem:[#allocation8 + $0x483]]
        %v653 = vstv %s652
        %v654 = vmul.f32 %v653, %v640
        %v655 = vadd.f32 %v651, %v654
        %v656 = vadd.f32 %v626, %v655
        %s657 = sld [smem:[#allocation3 + $0x500]]
        %s658 = sld [smem:[#allocation3 + $0x501]]
        %v659 = vstv %s657
        %v660 = vmul.f32 %v659, %v352
        %s661 = sld [smem:[#allocation6 + $0xa]]
        %v662 = vstv %s661
        %v663 = vadd.f32 %v660, %v662
        %v664 = vstv %s658
        %v665 = vmul.f32 %v664, %v353
        %v666 = vadd.f32 %v663, %v665
        %v667 = vmax.f32 %v666, 0.0
        %v668 = vmul.f32 %v664, %v354
        %v669 = vadd.f32 %v663, %v668
        %v670 = vmax.f32 %v669, 0.0
        %s671 = sld [smem:[#allocation8 + $0x500]]
        %v672 = vstv %s671
        %v673 = vmul.f32 %v672, %v667
        %s674 = sld [smem:[#allocation8 + $0x501]]
        %v675 = vstv %s674
        %v676 = vmul.f32 %v675, %v670
        %v677 = vadd.f32 %v673, %v676
        %v678 = vadd.f32 %v648, %v677
        %s679 = sld [smem:[#allocation8 + $0x502]]
        %v680 = vstv %s679
        %v681 = vmul.f32 %v680, %v667
        %s682 = sld [smem:[#allocation8 + $0x503]]
        %v683 = vstv %s682
        %v684 = vmul.f32 %v683, %v670
        %v685 = vadd.f32 %v681, %v684
        %v686 = vadd.f32 %v656, %v685
        %s687 = sld [smem:[#allocation3 + $0x580]]
        %s688 = sld [smem:[#allocation3 + $0x581]]
        %v689 = vstv %s687
        %v690 = vmul.f32 %v689, %v352
        %s691 = sld [smem:[#allocation6 + $0xb]]
        %v692 = vstv %s691
        %v693 = vadd.f32 %v690, %v692
        %v694 = vstv %s688
        %v695 = vmul.f32 %v694, %v353
        %v696 = vadd.f32 %v693, %v695
        %v697 = vmax.f32 %v696, 0.0
        %v698 = vmul.f32 %v694, %v354
        %v699 = vadd.f32 %v693, %v698
        %v700 = vmax.f32 %v699, 0.0
        %s701 = sld [smem:[#allocation8 + $0x580]]
        %v702 = vstv %s701
        %v703 = vmul.f32 %v702, %v697
        %s704 = sld [smem:[#allocation8 + $0x581]]
        %v705 = vstv %s704
        %v706 = vmul.f32 %v705, %v700
        %v707 = vadd.f32 %v703, %v706
        %v708 = vadd.f32 %v678, %v707
        %s709 = sld [smem:[#allocation8 + $0x582]]
        %v710 = vstv %s709
        %v711 = vmul.f32 %v710, %v697
        %s712 = sld [smem:[#allocation8 + $0x583]]
        %v713 = vstv %s712
        %v714 = vmul.f32 %v713, %v700
        %v715 = vadd.f32 %v711, %v714
        %v716 = vadd.f32 %v686, %v715
        %s717 = sld [smem:[#allocation3 + $0x600]]
        %s718 = sld [smem:[#allocation3 + $0x601]]
        %v719 = vstv %s717
        %v720 = vmul.f32 %v719, %v352
        %s721 = sld [smem:[#allocation6 + $0xc]]
        %v722 = vstv %s721
        %v723 = vadd.f32 %v720, %v722
        %v724 = vstv %s718
        %v725 = vmul.f32 %v724, %v353
        %v726 = vadd.f32 %v723, %v725
        %v727 = vmax.f32 %v726, 0.0
        %v728 = vmul.f32 %v724, %v354
        %v729 = vadd.f32 %v723, %v728
        %v730 = vmax.f32 %v729, 0.0
        %s731 = sld [smem:[#allocation8 + $0x600]]
        %v732 = vstv %s731
        %v733 = vmul.f32 %v732, %v727
        %s734 = sld [smem:[#allocation8 + $0x601]]
        %v735 = vstv %s734
        %v736 = vmul.f32 %v735, %v730
        %v737 = vadd.f32 %v733, %v736
        %v738 = vadd.f32 %v708, %v737
        %s739 = sld [smem:[#allocation8 + $0x602]]
        %v740 = vstv %s739
        %v741 = vmul.f32 %v740, %v727
        %s742 = sld [smem:[#allocation8 + $0x603]]
        %v743 = vstv %s742
        %v744 = vmul.f32 %v743, %v730
        %v745 = vadd.f32 %v741, %v744
        %v746 = vadd.f32 %v716, %v745
        %s747 = sld [smem:[#allocation3 + $0x680]]
        %s748 = sld [smem:[#allocation3 + $0x681]]
        %v749 = vstv %s747
        %v750 = vmul.f32 %v749, %v352
        %s751 = sld [smem:[#allocation6 + $0xd]]
        %v752 = vstv %s751
        %v753 = vadd.f32 %v750, %v752
        %v754 = vstv %s748
        %v755 = vmul.f32 %v754, %v353
        %v756 = vadd.f32 %v753, %v755
        %v757 = vmax.f32 %v756, 0.0
        %v758 = vmul.f32 %v754, %v354
        %v759 = vadd.f32 %v753, %v758
        %v760 = vmax.f32 %v759, 0.0
        %s761 = sld [smem:[#allocation8 + $0x680]]
        %v762 = vstv %s761
        %v763 = vmul.f32 %v762, %v757
        %s764 = sld [smem:[#allocation8 + $0x681]]
        %v765 = vstv %s764
        %v766 = vmul.f32 %v765, %v760
        %v767 = vadd.f32 %v763, %v766
        %v768 = vadd.f32 %v738, %v767
        %s769 = sld [smem:[#allocation8 + $0x682]]
        %v770 = vstv %s769
        %v771 = vmul.f32 %v770, %v757
        %s772 = sld [smem:[#allocation8 + $0x683]]
        %v773 = vstv %s772
        %v774 = vmul.f32 %v773, %v760
        %v775 = vadd.f32 %v771, %v774
        %v776 = vadd.f32 %v746, %v775
        %s777 = sld [smem:[#allocation3 + $0x700]]
        %s778 = sld [smem:[#allocation3 + $0x701]]
        %v779 = vstv %s777
        %v780 = vmul.f32 %v779, %v352
        %s781 = sld [smem:[#allocation6 + $0xe]]
        %v782 = vstv %s781
        %v783 = vadd.f32 %v780, %v782
        %v784 = vstv %s778
        %v785 = vmul.f32 %v784, %v353
        %v786 = vadd.f32 %v783, %v785
        %v787 = vmax.f32 %v786, 0.0
        %v788 = vmul.f32 %v784, %v354
        %v789 = vadd.f32 %v783, %v788
        %v790 = vmax.f32 %v789, 0.0
        %s791 = sld [smem:[#allocation8 + $0x700]]
        %v792 = vstv %s791
        %v793 = vmul.f32 %v792, %v787
        %s794 = sld [smem:[#allocation8 + $0x701]]
        %v795 = vstv %s794
        %v796 = vmul.f32 %v795, %v790
        %v797 = vadd.f32 %v793, %v796
        %v798 = vadd.f32 %v768, %v797
        %s799 = sld [smem:[#allocation8 + $0x702]]
        %v800 = vstv %s799
        %v801 = vmul.f32 %v800, %v787
        %s802 = sld [smem:[#allocation8 + $0x703]]
        %v803 = vstv %s802
        %v804 = vmul.f32 %v803, %v790
        %v805 = vadd.f32 %v801, %v804
        %v806 = vadd.f32 %v776, %v805
        %s807 = sld [smem:[#allocation3 + $0x780]]
        %s808 = sld [smem:[#allocation3 + $0x781]]
        %v809 = vstv %s807
        %v810 = vmul.f32 %v809, %v352
        %s811 = sld [smem:[#allocation6 + $0xf]]
        %v812 = vstv %s811
        %v813 = vadd.f32 %v810, %v812
        %v814 = vstv %s808
        %v815 = vmul.f32 %v814, %v353
        %v816 = vadd.f32 %v813, %v815
        %v817 = vmax.f32 %v816, 0.0
        %v818 = vmul.f32 %v814, %v354
        %v819 = vadd.f32 %v813, %v818
        %v820 = vmax.f32 %v819, 0.0
        %s821 = sld [smem:[#allocation8 + $0x780]]
        %v822 = vstv %s821
        %v823 = vmul.f32 %v822, %v817
        %s824 = sld [smem:[#allocation8 + $0x781]]
        %v825 = vstv %s824
        %v826 = vmul.f32 %v825, %v820
        %v827 = vadd.f32 %v823, %v826
        %v828 = vadd.f32 %v798, %v827
        %s829 = sld [smem:[#allocation8 + $0x782]]
        %v830 = vstv %s829
        %v831 = vmul.f32 %v830, %v817
        %s832 = sld [smem:[#allocation8 + $0x783]]
        %v833 = vstv %s832
        %v834 = vmul.f32 %v833, %v820
        %v835 = vadd.f32 %v831, %v834
        %v836 = vadd.f32 %v806, %v835
        %v837 = vlaneseq
        %v838 = vand.u32 %v837, 127
        %vm839 = vcmp.eq.s32.totalorder %v838, 0
        %840 = vrot.lane.b32.xlu0 %v828, 1
        %v841 = vpop.permute.xlu0 %840
        %v842 = vsel %vm839, 0.0, %v841
        %v843 = vadd.f32 %v836, %v842
        %844 = vst [vmem:[%s339] sm:$0xff] %v843
        %s845 = sand.u32 %s194, 1
        %s846 = scalar_lea.sflag [#allocation4], %s845
        %s847 = sand.u32 %s194, 1
        %s848 = smul.addr %s847, 8
        %s849 = scalar_lea.vmem [#allocation9], %s848
        // Predicated region
        $region61: #{tpu_custom_call.1} parent=47 // pred_check
          %p850 = pneg %p204
        $region62: #{tpu_custom_call.1} parent=47 // pred_check_branch
          %852 = sbr.rel (%p850) target = $region64
        $region63: #{tpu_custom_call.1} parent=47 // pred_region
          %s854 = ssub.s32 128, 128
          %855 = vsyncadd %s846, %s854
          %s856 = smul.addr %s24, 128
          %s857 = scalar_lea.hbm %s7, %s856
          %s859 = sshll.u32 %s849, 4
          %s860 = int_to_ptr.vmem [resolvable:$true] %s859
          %862 = dma.vmem_to_hbm [thread:$0]  %s860, 128, %s857, %s846
        $region64: #{tpu_custom_call.1} parent=47 // pred_fallthru
          _
      $region48: #{tpu_custom_call.1} parent=5 // pred_fallthru
        _
      %p863 = scmp.le.s32.totalorder 2, %s19
      // Predicated region
      $region65: #{tpu_custom_call.1} parent=5 // pred_check
        %p864 = pneg %p863
      $region66: #{tpu_custom_call.1} parent=5 // pred_check_branch
        %866 = sbr.rel (%p864) target = $region68
      $region67: #{tpu_custom_call.1} parent=5 // pred_region
        %s867 = ssub.s32 %s19, 2
        // Predicated region
        $region69: #{tpu_custom_call.1} parent=67 // pred_check
          %p868 = pneg %p210
        $region70: #{tpu_custom_call.1} parent=67 // pred_check_branch
          %870 = sbr.rel (%p868) target = $region72
        $region71: #{tpu_custom_call.1} parent=67 // pred_region
          %s871 = sand.u32 %s195, 1
          %s872 = scalar_lea.sflag [#allocation4], %s871
          %s873 = sand.u32 %s195, 1
          %s874 = smul.addr %s873, 8
          %s875 = scalar_lea.vmem [#allocation9], %s874
          %876 = dma.done %s872, 128
        $region72: #{tpu_custom_call.1} parent=67 // pred_fallthru
          _
      $region68: #{tpu_custom_call.1} parent=5 // pred_fallthru
        _
    $region6: #{tpu_custom_call.1} parent=1 // loop_footer
      %s23 = sadd.s32 1, %s19
    $region7: #{tpu_custom_call.1} parent=1 // loop_footer_branch
      %18 = sbr.rel target = $region3
    $region8: #{tpu_custom_call.1} parent=1 // loop_exit
      _
    %877 = vsyncpa [#allocation4], 1
    %s878 = scalar_lea.sflag [#allocation4], 1
    %879 = vsyncpa %s878, 1
    %880 = vsyncpa [#allocation5], 1
    %s881 = scalar_lea.sflag [#allocation5], 1
    %882 = vsyncpa %s881, 1
    %883 = vsyncpa [#allocation7], 1

</llo_original>
